<compile_context>
chip_gen: v5e
topology: v5e:2x2
jax: 0.10.0
libtpu: 0.0.40
codegen_flags: <defaults>
</compile_context>

<pallas_src>
import functools

import jax
import jax.numpy as jnp
from jax.experimental import pallas as pl
from jax.experimental.pallas import tpu as pltpu


def _softplus(x):
    # PyTorch Softplus(beta=1, threshold=20): x if x > 20 else log1p(exp(x))
    return jnp.where(x > 20.0, x, jnp.log1p(jnp.exp(jnp.minimum(x, 20.0))))


def nerf_k_kernel(sigma_act, mxu_dtype,      # static, bound via functools.partial
                  xz_ref,
                  wx_ref, bx_ref,
                  w1a_ref, w1b_ref, b1_ref,
                  w2_ref, b2_ref,
                  w3_ref, b3_ref,
                  w4_ref, b4_ref,
                  out_ref):
    f32 = jnp.float32
    xz = xz_ref[...]                          # (tm, 3 + k) f32, single load
    x = xz[:, :3].astype(mxu_dtype)           # (tm, 3)
    z = xz[:, 3:].astype(mxu_dtype)           # (tm, k)

    # xLayer + ReLU  (tiny K=3 matmul; bias add / ReLU kept in f32)
    xe = jnp.dot(x, wx_ref[...], preferred_element_type=f32) + bx_ref[...]
    xe = jnp.maximum(xe, 0.0)                 # (tm, 64) f32

    # Linear(64+k, 300) on concat([xe, z]) == xe @ W1[:64] + z @ W1[64:]
    h = (jnp.dot(xe.astype(mxu_dtype), w1a_ref[...], preferred_element_type=f32)
         + jnp.dot(z, w1b_ref[...], preferred_element_type=f32)
         + b1_ref[...])
    h = jnp.maximum(h, 0.0)                   # (tm, 300) f32

    h = jnp.dot(h.astype(mxu_dtype), w2_ref[...],
                preferred_element_type=f32) + b2_ref[...]
    h = jnp.maximum(h, 0.0)                   # (tm, 300)

    h = jnp.dot(h.astype(mxu_dtype), w3_ref[...],
                preferred_element_type=f32) + b3_ref[...]
    h = jnp.maximum(h, 0.0)                   # (tm, 300)

    out = jnp.dot(h.astype(mxu_dtype), w4_ref[...],
                  preferred_element_type=f32) + b4_ref[...]   # (tm, 4) f32

    # sigma activation on column 0, sigmoid on columns 1..3; single 4-wide store.
    if sigma_act == "softplus":
        sig = _softplus(out)
    else:  # "ReLU"
        sig = jnp.maximum(out, 0.0)
    col = jax.lax.broadcasted_iota(jnp.int32, out.shape, 1)
    out_ref[...] = jnp.where(col == 0, sig, jax.nn.sigmoid(out)).astype(out_ref.dtype)


def _round_up(n, m):
    return ((n + m - 1) // m) * m


def _choose_tm(tm_req, num_rows):
    """Pick a row tile: >= 2 grid steps when possible, MXU-friendly alignment."""
    # Clamp so the (parallel) grid has at least 2 steps -> megacore sharding on
    # v7x + prefetch/writeback overlap on all generations.
    cap = max(8, pl.cdiv(num_rows, 2))
    tm = min(max(tm_req, 8), cap)
    # Multiple of 256 for large tiles (256-wide MXU, bf16 sublane packing),
    # multiple of 8 for small ones (sublane constraint).
    mult = 256 if tm >= 256 else 8
    return _round_up(tm, mult)


def _default_vmem_limit_bytes():
    """96 MiB on 128-MiB-VMEM chips (v5e/v6e); 48 MiB on v7x / unknown."""
    try:
        cap = getattr(pltpu.get_tpu_info(), "vmem_capacity_bytes", None)
    except Exception:
        cap = None
    if cap is None:
        return 48 * 1024 * 1024
    return min(96 * 1024 * 1024, (int(cap) * 3) // 4)


def nerf_k_forward(x, z, params, *, sigma_activation="softplus",
                   tm=2048, use_bf16=True, vmem_limit_bytes=None):
    """x: (N, 3) f32; z: (N, nM, k) f32 -> (sigma (N,nM,1), c (N,nM,3)).

    tm: requested row tile; rounded to 256 (large) / 8 (small) and clamped so
        the grid has >= 2 steps.  2048 is a good default on v6e/v7x; 1024-2048
        on v5e.
    use_bf16: cast MXU operands to bf16 (f32 accumulation).  Set False for a
        bit-exact-ish f32 path (slower on the MXU).
    """
    N = x.shape[0]
    _, nM, k = z.shape
    M = N * nM

    # Glue: broadcast x rows across nM (12 B/row), reshape z (free, contiguous),
    # and merge into a single (M, 3+k) slab -> one input stream / one
    # lane-padded VMEM buffer pair instead of two.
    x_rows = jnp.broadcast_to(x[:, None, :], (N, nM, 3)).reshape(M, 3)
    z_rows = z.reshape(M, k)
    xz_rows = jnp.concatenate([x_rows, z_rows], axis=1)        # (M, 3+k)

    tm = _choose_tm(tm, M)
    M_pad = pl.cdiv(M, tm) * tm
    if M_pad != M:
        xz_rows = jnp.pad(xz_rows, ((0, M_pad - M), (0, 0)))

    (wx, bx, w1, b1, w2, b2, w3, b3, w4, b4) = params
    # Split W1 into the xEncoding part and the z part (concat order: [xe, z]).
    w1a = w1[:64, :]   # (64, 300)
    w1b = w1[64:, :]   # (k, 300)

    mxu_dtype = jnp.bfloat16 if use_bf16 else jnp.float32
    wx_c, w1a_c, w1b_c, w2_c, w3_c, w4_c = (
        w.astype(mxu_dtype) for w in (wx, w1a, w1b, w2, w3, w4))

    if vmem_limit_bytes is None:
        vmem_limit_bytes = _default_vmem_limit_bytes()

    grid = (M_pad // tm,)
    row_spec = lambda shape: pl.BlockSpec(shape, lambda i: (i, 0))
    full_spec = lambda shape: pl.BlockSpec(shape, lambda i: (0, 0))

    kernel = functools.partial(nerf_k_kernel, sigma_activation, mxu_dtype)

    out_rows = pl.pallas_call(
        kernel,
        out_shape=jax.ShapeDtypeStruct((M_pad, 4), jnp.float32),
        grid_spec=pltpu.PrefetchScalarGridSpec(
            num_scalar_prefetch=0,
            grid=grid,
            in_specs=[
                row_spec((tm, 3 + k)),      # [x | z] rows
                full_spec((3, 64)),         # wx
                full_spec((1, 64)),         # bx
                full_spec((64, 300)),       # w1a
                full_spec((k, 300)),        # w1b
                full_spec((1, 300)),        # b1
                full_spec((300, 300)),      # w2
                full_spec((1, 300)),        # b2
                full_spec((300, 300)),      # w3
                full_spec((1, 300)),        # b3
                full_spec((300, 4)),        # w4
                full_spec((1, 4)),          # b4
            ],
            out_specs=row_spec((tm, 4)),
        ),
        compiler_params=pltpu.CompilerParams(
            dimension_semantics=("parallel",),
            vmem_limit_bytes=vmem_limit_bytes),
    )(xz_rows, wx_c, bx, w1a_c, w1b_c, b1, w2_c, b2, w3_c, b3, w4_c, b4)

    sigma = out_rows[:M, 0:1].reshape(N, nM, 1)
    c = out_rows[:M, 1:4].reshape(N, nM, 3)
    return sigma, c


def init_params(key, k):
    """Deterministic synthetic weights with torch.nn.Linear-like shapes."""
    keys = jax.random.split(key, 10)

    def linear(kw, kb, fan_in, fan_out):
        bound = 1.0 / jnp.sqrt(fan_in)
        w = jax.random.uniform(kw, (fan_in, fan_out), jnp.float32, -bound, bound)
        b = jax.random.uniform(kb, (1, fan_out), jnp.float32, -bound, bound)
        return w, b

    wx, bx = linear(keys[0], keys[1], 3, 64)
    w1, b1 = linear(keys[2], keys[3], 64 + k, 300)
    w2, b2 = linear(keys[4], keys[5], 300, 300)
    w3, b3 = linear(keys[6], keys[7], 300, 300)
    w4, b4 = linear(keys[8], keys[9], 300, 4)
    return (wx, bx, w1, b1, w2, b2, w3, b3, w4, b4)


def reference_forward(x, z, params, sigma_activation="softplus"):
    """Pure-JAX f32 reference of the torch module."""
    (wx, bx, w1, b1, w2, b2, w3, b3, w4, b4) = params
    N = x.shape[0]
    _, nM, k = z.shape
    xe = jax.nn.relu(x @ wx + bx)                              # (N, 64)
    xe = jnp.broadcast_to(xe[:, None, :], (N, nM, 64)).reshape(N * nM, 64)
    zz = z.reshape(N * nM, k)
    h = jnp.concatenate([xe, zz], axis=1)
    h = jax.nn.relu(h @ w1 + b1)
    h = jax.nn.relu(h @ w2 + b2)
    h = jax.nn.relu(h @ w3 + b3)
    out = h @ w4 + b4
    if sigma_activation == "softplus":
        sigma = jax.nn.softplus(out[:, 0:1])
    else:
        sigma = jax.nn.relu(out[:, 0:1])
    c = jax.nn.sigmoid(out[:, 1:])
    return sigma.reshape(N, nM, 1), c.reshape(N, nM, 3)


if __name__ == "__main__":
    key = jax.random.PRNGKey(0)
    k_feat = 16
    N, nM = 4, 16    # 64 rows total

    k_params, k_x, k_z = jax.random.split(key, 3)
    params = init_params(k_params, k_feat)
    x = jax.random.normal(k_x, (N, 3), jnp.float32)
    z = jax.random.normal(k_z, (N, nM, k_feat), jnp.float32)

    sigma_ref, c_ref = reference_forward(x, z, params, "softplus")

    # 1) f32 MXU path, multi-step grid (tm clamps to 32 -> 2 steps): exact check.
    sigma, c = nerf_k_forward(x, z, params, sigma_activation="softplus",
                              tm=32, use_bf16=False)
    jax.block_until_ready((sigma, c))
    assert sigma.shape == (N, nM, 1) and c.shape == (N, nM, 3)
    assert jnp.allclose(sigma, sigma_ref, atol=1e-4, rtol=1e-4)
    assert jnp.allclose(c, c_ref, atol=1e-4, rtol=1e-4)

    # 2) bf16 MXU path (default fast path; tm=2048 request clamps to the rows).
    sigma_bf, c_bf = nerf_k_forward(x, z, params, sigma_activation="softplus")
    jax.block_until_ready((sigma_bf, c_bf))
    assert jnp.allclose(sigma_bf, sigma_ref, atol=5e-2, rtol=5e-2)
    assert jnp.allclose(c_bf, c_ref, atol=5e-2, rtol=5e-2)

    # 3) ReLU sigma-activation variant.
    sigma_r, c_r = nerf_k_forward(x, z, params, sigma_activation="ReLU",
                                  use_bf16=False)
    sr_ref, cr_ref = reference_forward(x, z, params, "ReLU")
    jax.block_until_ready((sigma_r, c_r))
    assert jnp.allclose(sigma_r, sr_ref, atol=1e-4, rtol=1e-4)
    assert jnp.allclose(c_r, cr_ref, atol=1e-4, rtol=1e-4)

    print("KERNEL_OK")
</pallas_src>

<mosaic_0001>
module attributes {stable_mosaic.version = 11 : i64} {
  func.func @nerf_k_kernel(%arg0: i32, %arg1: memref<32x19xf32, #tpu.memory_space<vmem>>, %arg2: memref<3x64xf32, #tpu.memory_space<vmem>>, %arg3: memref<1x64xf32, #tpu.memory_space<vmem>>, %arg4: memref<64x300xf32, #tpu.memory_space<vmem>>, %arg5: memref<16x300xf32, #tpu.memory_space<vmem>>, %arg6: memref<1x300xf32, #tpu.memory_space<vmem>>, %arg7: memref<300x300xf32, #tpu.memory_space<vmem>>, %arg8: memref<1x300xf32, #tpu.memory_space<vmem>>, %arg9: memref<300x300xf32, #tpu.memory_space<vmem>>, %arg10: memref<1x300xf32, #tpu.memory_space<vmem>>, %arg11: memref<300x4xf32, #tpu.memory_space<vmem>>, %arg12: memref<1x4xf32, #tpu.memory_space<vmem>>, %arg13: memref<32x4xf32, #tpu.memory_space<vmem>>) attributes {dimension_semantics = [#tpu.dimension_semantics<parallel>], iteration_bounds = array<i64: 2>, scalar_prefetch = 0 : i64, scratch_operands = 0 : i64, tpu.core_type = #tpu.core_type<tc>, window_params = [{transform_indices = @transform_0, window_bounds = array<i64: 32, 19>}, {pipeline_mode = #tpu.pipeline_mode<synchronous>, transform_indices = @transform_1, window_bounds = array<i64: 3, 64>}, {pipeline_mode = #tpu.pipeline_mode<synchronous>, transform_indices = @transform_2, window_bounds = array<i64: 1, 64>}, {pipeline_mode = #tpu.pipeline_mode<synchronous>, transform_indices = @transform_3, window_bounds = array<i64: 64, 300>}, {pipeline_mode = #tpu.pipeline_mode<synchronous>, transform_indices = @transform_4, window_bounds = array<i64: 16, 300>}, {pipeline_mode = #tpu.pipeline_mode<synchronous>, transform_indices = @transform_5, window_bounds = array<i64: 1, 300>}, {pipeline_mode = #tpu.pipeline_mode<synchronous>, transform_indices = @transform_6, window_bounds = array<i64: 300, 300>}, {pipeline_mode = #tpu.pipeline_mode<synchronous>, transform_indices = @transform_7, window_bounds = array<i64: 1, 300>}, {pipeline_mode = #tpu.pipeline_mode<synchronous>, transform_indices = @transform_8, window_bounds = array<i64: 300, 300>}, {pipeline_mode = #tpu.pipeline_mode<synchronous>, transform_indices = @transform_9, window_bounds = array<i64: 1, 300>}, {pipeline_mode = #tpu.pipeline_mode<synchronous>, transform_indices = @transform_10, window_bounds = array<i64: 300, 4>}, {pipeline_mode = #tpu.pipeline_mode<synchronous>, transform_indices = @transform_11, window_bounds = array<i64: 1, 4>}, {transform_indices = @transform_12, window_bounds = array<i64: 32, 4>}]} {
    %c0 = arith.constant 0 : index
    %c0_0 = arith.constant 0 : index
    %0 = vector.load %arg1[%c0, %c0_0] : memref<32x19xf32, #tpu.memory_space<vmem>>, vector<32x19xf32>
    %1 = vector.extract_strided_slice %0 {offsets = [0, 0], sizes = [32, 3], strides = [1, 1]} : vector<32x19xf32> to vector<32x3xf32>
    %2 = vector.extract_strided_slice %0 {offsets = [0, 3], sizes = [32, 16], strides = [1, 1]} : vector<32x19xf32> to vector<32x16xf32>
    %c0_1 = arith.constant 0 : index
    %c0_2 = arith.constant 0 : index
    %3 = vector.load %arg2[%c0_1, %c0_2] : memref<3x64xf32, #tpu.memory_space<vmem>>, vector<3x64xf32>
    %cst = arith.constant dense<0.000000e+00> : vector<32x64xf32>
    %4 = tpu.matmul %1, %3, %cst {dimension_numbers = #tpu.dot_dimension_numbers<[1], [0], [0], [1], [0, 0, 1, 1], [], []>} : vector<32x3xf32>, vector<3x64xf32>, vector<32x64xf32> -> vector<32x64xf32>
    %c0_3 = arith.constant 0 : index
    %c0_4 = arith.constant 0 : index
    %5 = vector.load %arg3[%c0_3, %c0_4] : memref<1x64xf32, #tpu.memory_space<vmem>>, vector<1x64xf32>
    %6 = vector.broadcast %5 : vector<1x64xf32> to vector<32x64xf32>
    %7 = arith.addf %4, %6 : vector<32x64xf32>
    %cst_5 = arith.constant 0.000000e+00 : f32
    %8 = vector.broadcast %cst_5 : f32 to vector<32x64xf32>
    %9 = arith.maximumf %7, %8 : vector<32x64xf32>
    %c0_6 = arith.constant 0 : index
    %c0_7 = arith.constant 0 : index
    %10 = vector.load %arg4[%c0_6, %c0_7] : memref<64x300xf32, #tpu.memory_space<vmem>>, vector<64x300xf32>
    %cst_8 = arith.constant dense<0.000000e+00> : vector<32x300xf32>
    %11 = tpu.matmul %9, %10, %cst_8 {dimension_numbers = #tpu.dot_dimension_numbers<[1], [0], [0], [1], [0, 0, 1, 1], [], []>} : vector<32x64xf32>, vector<64x300xf32>, vector<32x300xf32> -> vector<32x300xf32>
    %c0_9 = arith.constant 0 : index
    %c0_10 = arith.constant 0 : index
    %12 = vector.load %arg5[%c0_9, %c0_10] : memref<16x300xf32, #tpu.memory_space<vmem>>, vector<16x300xf32>
    %cst_11 = arith.constant dense<0.000000e+00> : vector<32x300xf32>
    %13 = tpu.matmul %2, %12, %cst_11 {dimension_numbers = #tpu.dot_dimension_numbers<[1], [0], [0], [1], [0, 0, 1, 1], [], []>} : vector<32x16xf32>, vector<16x300xf32>, vector<32x300xf32> -> vector<32x300xf32>
    %14 = arith.addf %11, %13 : vector<32x300xf32>
    %c0_12 = arith.constant 0 : index
    %c0_13 = arith.constant 0 : index
    %15 = vector.load %arg6[%c0_12, %c0_13] : memref<1x300xf32, #tpu.memory_space<vmem>>, vector<1x300xf32>
    %16 = vector.broadcast %15 : vector<1x300xf32> to vector<32x300xf32>
    %17 = arith.addf %14, %16 : vector<32x300xf32>
    %cst_14 = arith.constant 0.000000e+00 : f32
    %18 = vector.broadcast %cst_14 : f32 to vector<32x300xf32>
    %19 = arith.maximumf %17, %18 : vector<32x300xf32>
    %c0_15 = arith.constant 0 : index
    %c0_16 = arith.constant 0 : index
    %20 = vector.load %arg7[%c0_15, %c0_16] : memref<300x300xf32, #tpu.memory_space<vmem>>, vector<300x300xf32>
    %cst_17 = arith.constant dense<0.000000e+00> : vector<32x300xf32>
    %21 = tpu.matmul %19, %20, %cst_17 {dimension_numbers = #tpu.dot_dimension_numbers<[1], [0], [0], [1], [0, 0, 1, 1], [], []>} : vector<32x300xf32>, vector<300x300xf32>, vector<32x300xf32> -> vector<32x300xf32>
    %c0_18 = arith.constant 0 : index
    %c0_19 = arith.constant 0 : index
    %22 = vector.load %arg8[%c0_18, %c0_19] : memref<1x300xf32, #tpu.memory_space<vmem>>, vector<1x300xf32>
    %23 = vector.broadcast %22 : vector<1x300xf32> to vector<32x300xf32>
    %24 = arith.addf %21, %23 : vector<32x300xf32>
    %cst_20 = arith.constant 0.000000e+00 : f32
    %25 = vector.broadcast %cst_20 : f32 to vector<32x300xf32>
    %26 = arith.maximumf %24, %25 : vector<32x300xf32>
    %c0_21 = arith.constant 0 : index
    %c0_22 = arith.constant 0 : index
    %27 = vector.load %arg9[%c0_21, %c0_22] : memref<300x300xf32, #tpu.memory_space<vmem>>, vector<300x300xf32>
    %cst_23 = arith.constant dense<0.000000e+00> : vector<32x300xf32>
    %28 = tpu.matmul %26, %27, %cst_23 {dimension_numbers = #tpu.dot_dimension_numbers<[1], [0], [0], [1], [0, 0, 1, 1], [], []>} : vector<32x300xf32>, vector<300x300xf32>, vector<32x300xf32> -> vector<32x300xf32>
    %c0_24 = arith.constant 0 : index
    %c0_25 = arith.constant 0 : index
    %29 = vector.load %arg10[%c0_24, %c0_25] : memref<1x300xf32, #tpu.memory_space<vmem>>, vector<1x300xf32>
    %30 = vector.broadcast %29 : vector<1x300xf32> to vector<32x300xf32>
    %31 = arith.addf %28, %30 : vector<32x300xf32>
    %cst_26 = arith.constant 0.000000e+00 : f32
    %32 = vector.broadcast %cst_26 : f32 to vector<32x300xf32>
    %33 = arith.maximumf %31, %32 : vector<32x300xf32>
    %c0_27 = arith.constant 0 : index
    %c0_28 = arith.constant 0 : index
    %34 = vector.load %arg11[%c0_27, %c0_28] : memref<300x4xf32, #tpu.memory_space<vmem>>, vector<300x4xf32>
    %cst_29 = arith.constant dense<0.000000e+00> : vector<32x4xf32>
    %35 = tpu.matmul %33, %34, %cst_29 {dimension_numbers = #tpu.dot_dimension_numbers<[1], [0], [0], [1], [0, 0, 1, 1], [], []>} : vector<32x300xf32>, vector<300x4xf32>, vector<32x4xf32> -> vector<32x4xf32>
    %c0_30 = arith.constant 0 : index
    %c0_31 = arith.constant 0 : index
    %36 = vector.load %arg12[%c0_30, %c0_31] : memref<1x4xf32, #tpu.memory_space<vmem>>, vector<1x4xf32>
    %37 = vector.broadcast %36 : vector<1x4xf32> to vector<32x4xf32>
    %38 = arith.addf %35, %37 : vector<32x4xf32>
    %cst_32 = arith.constant 2.000000e+01 : f32
    %39 = vector.broadcast %cst_32 : f32 to vector<32x4xf32>
    %40 = arith.cmpf ogt, %38, %39 : vector<32x4xf32>
    %cst_33 = arith.constant 2.000000e+01 : f32
    %41 = vector.broadcast %cst_33 : f32 to vector<32x4xf32>
    %42 = arith.minimumf %38, %41 : vector<32x4xf32>
    %43 = math.exp %42 : vector<32x4xf32>
    %44 = math.log1p %43 : vector<32x4xf32>
    %45 = arith.select %40, %38, %44 : vector<32x4xi1>, vector<32x4xf32>
    %46 = tpu.iota {dimensions = array<i32: 1>} : vector<32x4xi32>
    %c0_i32 = arith.constant 0 : i32
    %47 = vector.broadcast %c0_i32 : i32 to vector<32x4xi32>
    %48 = arith.cmpi eq, %46, %47 : vector<32x4xi32>
    %49 = arith.negf %38 : vector<32x4xf32>
    %50 = math.exp %49 : vector<32x4xf32>
    %cst_34 = arith.constant 1.000000e+00 : f32
    %51 = vector.broadcast %cst_34 : f32 to vector<32x4xf32>
    %52 = arith.addf %51, %50 : vector<32x4xf32>
    %53 = arith.divf %51, %52 : vector<32x4xf32>
    %54 = arith.select %48, %45, %53 : vector<32x4xi1>, vector<32x4xf32>
    %c0_35 = arith.constant 0 : index
    %c0_36 = arith.constant 0 : index
    %55 = vector.load %arg13[%c0_35, %c0_36] : memref<32x4xf32, #tpu.memory_space<vmem>>, vector<32x4xf32>
    tpu.vector_store %arg13[%c0_35, %c0_36], %54 {strides = array<i32>} : memref<32x4xf32, #tpu.memory_space<vmem>>, vector<32x4xf32>,
    return
  }
  func.func @transform_0(%arg0: i32) -> (i32, i32) {
    %c0_i32 = arith.constant 0 : i32
    %c0_i32_0 = arith.constant 0 : i32
    return %arg0, %c0_i32 : i32, i32
  }
  func.func @transform_1(%arg0: i32) -> (i32, i32) {
    %c0_i32 = arith.constant 0 : i32
    %c0_i32_0 = arith.constant 0 : i32
    %c0_i32_1 = arith.constant 0 : i32
    return %c0_i32, %c0_i32_0 : i32, i32
  }
  func.func @transform_2(%arg0: i32) -> (i32, i32) {
    %c0_i32 = arith.constant 0 : i32
    %c0_i32_0 = arith.constant 0 : i32
    %c0_i32_1 = arith.constant 0 : i32
    return %c0_i32, %c0_i32_0 : i32, i32
  }
  func.func @transform_3(%arg0: i32) -> (i32, i32) {
    %c0_i32 = arith.constant 0 : i32
    %c0_i32_0 = arith.constant 0 : i32
    %c0_i32_1 = arith.constant 0 : i32
    return %c0_i32, %c0_i32_0 : i32, i32
  }
  func.func @transform_4(%arg0: i32) -> (i32, i32) {
    %c0_i32 = arith.constant 0 : i32
    %c0_i32_0 = arith.constant 0 : i32
    %c0_i32_1 = arith.constant 0 : i32
    return %c0_i32, %c0_i32_0 : i32, i32
  }
  func.func @transform_5(%arg0: i32) -> (i32, i32) {
    %c0_i32 = arith.constant 0 : i32
    %c0_i32_0 = arith.constant 0 : i32
    %c0_i32_1 = arith.constant 0 : i32
    return %c0_i32, %c0_i32_0 : i32, i32
  }
  func.func @transform_6(%arg0: i32) -> (i32, i32) {
    %c0_i32 = arith.constant 0 : i32
    %c0_i32_0 = arith.constant 0 : i32
    %c0_i32_1 = arith.constant 0 : i32
    return %c0_i32, %c0_i32_0 : i32, i32
  }
  func.func @transform_7(%arg0: i32) -> (i32, i32) {
    %c0_i32 = arith.constant 0 : i32
    %c0_i32_0 = arith.constant 0 : i32
    %c0_i32_1 = arith.constant 0 : i32
    return %c0_i32, %c0_i32_0 : i32, i32
  }
  func.func @transform_8(%arg0: i32) -> (i32, i32) {
    %c0_i32 = arith.constant 0 : i32
    %c0_i32_0 = arith.constant 0 : i32
    %c0_i32_1 = arith.constant 0 : i32
    return %c0_i32, %c0_i32_0 : i32, i32
  }
  func.func @transform_9(%arg0: i32) -> (i32, i32) {
    %c0_i32 = arith.constant 0 : i32
    %c0_i32_0 = arith.constant 0 : i32
    %c0_i32_1 = arith.constant 0 : i32
    return %c0_i32, %c0_i32_0 : i32, i32
  }
  func.func @transform_10(%arg0: i32) -> (i32, i32) {
    %c0_i32 = arith.constant 0 : i32
    %c0_i32_0 = arith.constant 0 : i32
    %c0_i32_1 = arith.constant 0 : i32
    return %c0_i32, %c0_i32_0 : i32, i32
  }
  func.func @transform_11(%arg0: i32) -> (i32, i32) {
    %c0_i32 = arith.constant 0 : i32
    %c0_i32_0 = arith.constant 0 : i32
    %c0_i32_1 = arith.constant 0 : i32
    return %c0_i32, %c0_i32_0 : i32, i32
  }
  func.func @transform_12(%arg0: i32) -> (i32, i32) {
    %c0_i32 = arith.constant 0 : i32
    %c0_i32_0 = arith.constant 0 : i32
    return %arg0, %c0_i32 : i32, i32
  }
}

</mosaic_0001>

<llo_original>
// kernel: tpu_custom_call.1
$region0: #{tpu_custom_call.1}
  #allocation0 [shape = 'u32[]', space=smem, size = 0x4, offset = 0x4, fixed_abs, tag = 'smem constant byte address 0x4 - core index']
  #allocation1 [shape = 'u32[72,128]{1,0:T(1,128)}', space=vmem, size = 0x9000, scoped, tag = 'internal scratch']
  %s0 = inlined_call_operand.vmem [shape: f32[64,19], index: 0, kind: input, shape index: {}]
  %s1 = inlined_call_operand.vmem [shape: f32[3,64], index: 1, kind: input, shape index: {}]
  %s2 = inlined_call_operand.vmem [shape: f32[1,64], index: 2, kind: input, shape index: {}]
  %s3 = inlined_call_operand.vmem [shape: f32[64,300], index: 3, kind: input, shape index: {}]
  %s4 = inlined_call_operand.vmem [shape: f32[16,300], index: 4, kind: input, shape index: {}]
  %s5 = inlined_call_operand.vmem [shape: f32[1,300], index: 5, kind: input, shape index: {}]
  %s6 = inlined_call_operand.hbm [shape: f32[300,300], index: 6, kind: input, shape index: {}]
  %s7 = inlined_call_operand.vmem [shape: f32[1,300], index: 7, kind: input, shape index: {}]
  %s8 = inlined_call_operand.hbm [shape: f32[300,300], index: 8, kind: input, shape index: {}]
  %s9 = inlined_call_operand.vmem [shape: f32[1,300], index: 9, kind: input, shape index: {}]
  %s10 = inlined_call_operand.vmem [shape: f32[300,4], index: 10, kind: input, shape index: {}]
  %s11 = inlined_call_operand.vmem [shape: f32[1,4], index: 11, kind: input, shape index: {}]
  %s12 = inlined_call_operand.vmem [shape: f32[64,4], index: 12, kind: output, shape index: {}]
  %s13 = sld [smem:[#allocation0]]
  $region89: #{tpu_custom_call.1} parent=0
    _
  %s15 = ssub.s32 1, %s13
  %s16 = scalar_select 0, %s15, %s13
  $region1: #{tpu_custom_call.1} parent=0
    #allocation2 [shape = 'u8[466944]{0}', space=vmem, size = 0x72000, scoped, tag = 'input window, operand 6, single buffered']
    #allocation3 [shape = 's32[2]{0}', space=sflag, size = 0x8, scoped, tag = 'scoped memory for tpu_custom_call.1']
    #allocation4 [shape = 'u8[466944]{0}', space=vmem, size = 0x72000, scoped, tag = 'input window, operand 8, single buffered']
    #allocation5 [shape = 's32[1]{0}', space=sflag, size = 0x4, scoped, tag = 'scoped memory for tpu_custom_call.1']
    %17 = vsyncpa [#allocation3], 0
    %18 = vsyncpa [#allocation5], 0
    loop: start=0, step=1, limit=4
    $region2: #{tpu_custom_call.1} parent=1 // loop_pre_header
      _
    $region3: #{tpu_custom_call.1} parent=1 // loop_header
      %s20 = sphi 0, %s24
      %p21 = scmp.ge.s32.totalorder %s20, 4
      %s30 = sphi 0, %s32
      %s33 = sphi 0, %s30
      %s34 = sphi 0, %s33
      %s50 = sphi 0, %s34
      %s54 = sphi 0, %s54
      %s56 = sphi 0, %s54
      %s57 = sphi 0, %s56
      %s71 = sphi 0, %s57
      %s75 = sphi 0, %s75
      %s77 = sphi 0, %s75
      %s78 = sphi 0, %s77
      %s92 = sphi 0, %s78
      %s96 = sphi 0, %s96
      %s98 = sphi 0, %s96
      %s99 = sphi 0, %s98
      %s113 = sphi 0, %s99
      %s117 = sphi 0, %s117
      %s119 = sphi 0, %s117
      %s120 = sphi 0, %s119
      %s134 = sphi 0, %s120
      %s138 = sphi 0, %s138
      %s140 = sphi 0, %s138
      %s141 = sphi 0, %s140
      %s155 = sphi 0, %s141
      %s159 = sphi 0, %s159
      %s161 = sphi 0, %s159
      %s162 = sphi 0, %s161
      %s176 = sphi 0, %s162
      %s180 = sphi 0, %s180
      %s182 = sphi 0, %s180
      %s183 = sphi 0, %s182
      %s197 = sphi 0, %s183
      %s201 = sphi 0, %s201
      %s203 = sphi 0, %s201
      %s204 = sphi 0, %s203
      %s218 = sphi 0, %s204
      %s222 = sphi 0, %s222
      %s224 = sphi 0, %s222
      %s225 = sphi 0, %s224
      %s239 = sphi 0, %s225
      %s243 = sphi 0, %s243
      %s245 = sphi 0, %s243
      %s246 = sphi 0, %s245
      %s260 = sphi 0, %s246
      %s264 = sphi 0, %s264
      %s266 = sphi 0, %s264
      %s267 = sphi 0, %s266
      %s281 = sphi 0, %s267
      %s287 = sphi 0, %s289
      %s290 = sphi 0, %s287
      %s291 = sphi 0, %s290
      %s307 = sphi 0, %s291
    $region4: #{tpu_custom_call.1} parent=1 // loop_header_branch
      %23 = sbr.rel (%p21) target = $region8
    $region5: #{tpu_custom_call.1} parent=1 // loop_body
      %s25 = ssub.s32 %s20, 1
      %s26 = ssub.s32 %s20, 2
      %s27 = sadd.s32 %s20, 1
      %s28 = ssub.s32 %s20, %s27
      %p29 = scmp.eq.s32.totalorder %s28, 0
      %s31 = sadd.s32 %s30, 1
      %s32 = scalar_select %p29, %s30, %s31
      %p35 = pneg %p29
      %p36 = scmp.eq.s32.totalorder %s20, 1
      %p37 = por %p35, %p36
      %p38 = scmp.ne.s32.totalorder %s30, %s33
      %p39 = scmp.eq.s32.totalorder %s20, 0
      %p40 = por %p38, %p39
      %p41 = scmp.ne.s32.totalorder %s30, %s33
      %p42 = scmp.eq.s32.totalorder %s25, 1
      %p43 = por %p41, %p42
      %p44 = scmp.ne.s32.totalorder %s33, %s34
      %p45 = scmp.eq.s32.totalorder %s25, 0
      %p46 = por %p44, %p45
      %p47 = scmp.ne.s32.totalorder %s33, %s34
      %p48 = scmp.eq.s32.totalorder %s26, 1
      %p49 = por %p47, %p48
      %p51 = scmp.ne.s32.totalorder %s34, %s50
      %p52 = scmp.eq.s32.totalorder %s26, 0
      %p53 = por %p51, %p52
      %s55 = sadd.s32 %s54, 1
      %p58 = scmp.eq.s32.totalorder %s20, 1
      %p59 = scmp.ne.s32.totalorder %s54, %s56
      %p60 = scmp.eq.s32.totalorder %s20, 0
      %p61 = por %p59, %p60
      %p62 = scmp.ne.s32.totalorder %s54, %s56
      %p63 = scmp.eq.s32.totalorder %s25, 1
      %p64 = por %p62, %p63
      %p65 = scmp.ne.s32.totalorder %s56, %s57
      %p66 = scmp.eq.s32.totalorder %s25, 0
      %p67 = por %p65, %p66
      %p68 = scmp.ne.s32.totalorder %s56, %s57
      %p69 = scmp.eq.s32.totalorder %s26, 1
      %p70 = por %p68, %p69
      %p72 = scmp.ne.s32.totalorder %s57, %s71
      %p73 = scmp.eq.s32.totalorder %s26, 0
      %p74 = por %p72, %p73
      %s76 = sadd.s32 %s75, 1
      %p79 = scmp.eq.s32.totalorder %s20, 1
      %p80 = scmp.ne.s32.totalorder %s75, %s77
      %p81 = scmp.eq.s32.totalorder %s20, 0
      %p82 = por %p80, %p81
      %p83 = scmp.ne.s32.totalorder %s75, %s77
      %p84 = scmp.eq.s32.totalorder %s25, 1
      %p85 = por %p83, %p84
      %p86 = scmp.ne.s32.totalorder %s77, %s78
      %p87 = scmp.eq.s32.totalorder %s25, 0
      %p88 = por %p86, %p87
      %p89 = scmp.ne.s32.totalorder %s77, %s78
      %p90 = scmp.eq.s32.totalorder %s26, 1
      %p91 = por %p89, %p90
      %p93 = scmp.ne.s32.totalorder %s78, %s92
      %p94 = scmp.eq.s32.totalorder %s26, 0
      %p95 = por %p93, %p94
      %s97 = sadd.s32 %s96, 1
      %p100 = scmp.eq.s32.totalorder %s20, 1
      %p101 = scmp.ne.s32.totalorder %s96, %s98
      %p102 = scmp.eq.s32.totalorder %s20, 0
      %p103 = por %p101, %p102
      %p104 = scmp.ne.s32.totalorder %s96, %s98
      %p105 = scmp.eq.s32.totalorder %s25, 1
      %p106 = por %p104, %p105
      %p107 = scmp.ne.s32.totalorder %s98, %s99
      %p108 = scmp.eq.s32.totalorder %s25, 0
      %p109 = por %p107, %p108
      %p110 = scmp.ne.s32.totalorder %s98, %s99
      %p111 = scmp.eq.s32.totalorder %s26, 1
      %p112 = por %p110, %p111
      %p114 = scmp.ne.s32.totalorder %s99, %s113
      %p115 = scmp.eq.s32.totalorder %s26, 0
      %p116 = por %p114, %p115
      %s118 = sadd.s32 %s117, 1
      %p121 = scmp.eq.s32.totalorder %s20, 1
      %p122 = scmp.ne.s32.totalorder %s117, %s119
      %p123 = scmp.eq.s32.totalorder %s20, 0
      %p124 = por %p122, %p123
      %p125 = scmp.ne.s32.totalorder %s117, %s119
      %p126 = scmp.eq.s32.totalorder %s25, 1
      %p127 = por %p125, %p126
      %p128 = scmp.ne.s32.totalorder %s119, %s120
      %p129 = scmp.eq.s32.totalorder %s25, 0
      %p130 = por %p128, %p129
      %p131 = scmp.ne.s32.totalorder %s119, %s120
      %p132 = scmp.eq.s32.totalorder %s26, 1
      %p133 = por %p131, %p132
      %p135 = scmp.ne.s32.totalorder %s120, %s134
      %p136 = scmp.eq.s32.totalorder %s26, 0
      %p137 = por %p135, %p136
      %s139 = sadd.s32 %s138, 1
      %p142 = scmp.eq.s32.totalorder %s20, 1
      %p143 = scmp.ne.s32.totalorder %s138, %s140
      %p144 = scmp.eq.s32.totalorder %s20, 0
      %p145 = por %p143, %p144
      %p146 = scmp.ne.s32.totalorder %s138, %s140
      %p147 = scmp.eq.s32.totalorder %s25, 1
      %p148 = por %p146, %p147
      %p149 = scmp.ne.s32.totalorder %s140, %s141
      %p150 = scmp.eq.s32.totalorder %s25, 0
      %p151 = por %p149, %p150
      %p152 = scmp.ne.s32.totalorder %s140, %s141
      %p153 = scmp.eq.s32.totalorder %s26, 1
      %p154 = por %p152, %p153
      %p156 = scmp.ne.s32.totalorder %s141, %s155
      %p157 = scmp.eq.s32.totalorder %s26, 0
      %p158 = por %p156, %p157
      %s160 = sadd.s32 %s159, 1
      %p163 = scmp.eq.s32.totalorder %s20, 1
      %p164 = scmp.ne.s32.totalorder %s159, %s161
      %p165 = scmp.eq.s32.totalorder %s20, 0
      %p166 = por %p164, %p165
      %p167 = scmp.ne.s32.totalorder %s159, %s161
      %p168 = scmp.eq.s32.totalorder %s25, 1
      %p169 = por %p167, %p168
      %p170 = scmp.ne.s32.totalorder %s161, %s162
      %p171 = scmp.eq.s32.totalorder %s25, 0
      %p172 = por %p170, %p171
      %p173 = scmp.ne.s32.totalorder %s161, %s162
      %p174 = scmp.eq.s32.totalorder %s26, 1
      %p175 = por %p173, %p174
      %p177 = scmp.ne.s32.totalorder %s162, %s176
      %p178 = scmp.eq.s32.totalorder %s26, 0
      %p179 = por %p177, %p178
      %s181 = sadd.s32 %s180, 1
      %p184 = scmp.eq.s32.totalorder %s20, 1
      %p185 = scmp.ne.s32.totalorder %s180, %s182
      %p186 = scmp.eq.s32.totalorder %s20, 0
      %p187 = por %p185, %p186
      %p188 = scmp.ne.s32.totalorder %s180, %s182
      %p189 = scmp.eq.s32.totalorder %s25, 1
      %p190 = por %p188, %p189
      %p191 = scmp.ne.s32.totalorder %s182, %s183
      %p192 = scmp.eq.s32.totalorder %s25, 0
      %p193 = por %p191, %p192
      %p194 = scmp.ne.s32.totalorder %s182, %s183
      %p195 = scmp.eq.s32.totalorder %s26, 1
      %p196 = por %p194, %p195
      %p198 = scmp.ne.s32.totalorder %s183, %s197
      %p199 = scmp.eq.s32.totalorder %s26, 0
      %p200 = por %p198, %p199
      %s202 = sadd.s32 %s201, 1
      %p205 = scmp.eq.s32.totalorder %s20, 1
      %p206 = scmp.ne.s32.totalorder %s201, %s203
      %p207 = scmp.eq.s32.totalorder %s20, 0
      %p208 = por %p206, %p207
      %p209 = scmp.ne.s32.totalorder %s201, %s203
      %p210 = scmp.eq.s32.totalorder %s25, 1
      %p211 = por %p209, %p210
      %p212 = scmp.ne.s32.totalorder %s203, %s204
      %p213 = scmp.eq.s32.totalorder %s25, 0
      %p214 = por %p212, %p213
      %p215 = scmp.ne.s32.totalorder %s203, %s204
      %p216 = scmp.eq.s32.totalorder %s26, 1
      %p217 = por %p215, %p216
      %p219 = scmp.ne.s32.totalorder %s204, %s218
      %p220 = scmp.eq.s32.totalorder %s26, 0
      %p221 = por %p219, %p220
      %s223 = sadd.s32 %s222, 1
      %p226 = scmp.eq.s32.totalorder %s20, 1
      %p227 = scmp.ne.s32.totalorder %s222, %s224
      %p228 = scmp.eq.s32.totalorder %s20, 0
      %p229 = por %p227, %p228
      %p230 = scmp.ne.s32.totalorder %s222, %s224
      %p231 = scmp.eq.s32.totalorder %s25, 1
      %p232 = por %p230, %p231
      %p233 = scmp.ne.s32.totalorder %s224, %s225
      %p234 = scmp.eq.s32.totalorder %s25, 0
      %p235 = por %p233, %p234
      %p236 = scmp.ne.s32.totalorder %s224, %s225
      %p237 = scmp.eq.s32.totalorder %s26, 1
      %p238 = por %p236, %p237
      %p240 = scmp.ne.s32.totalorder %s225, %s239
      %p241 = scmp.eq.s32.totalorder %s26, 0
      %p242 = por %p240, %p241
      %s244 = sadd.s32 %s243, 1
      %p247 = scmp.eq.s32.totalorder %s20, 1
      %p248 = scmp.ne.s32.totalorder %s243, %s245
      %p249 = scmp.eq.s32.totalorder %s20, 0
      %p250 = por %p248, %p249
      %p251 = scmp.ne.s32.totalorder %s243, %s245
      %p252 = scmp.eq.s32.totalorder %s25, 1
      %p253 = por %p251, %p252
      %p254 = scmp.ne.s32.totalorder %s245, %s246
      %p255 = scmp.eq.s32.totalorder %s25, 0
      %p256 = por %p254, %p255
      %p257 = scmp.ne.s32.totalorder %s245, %s246
      %p258 = scmp.eq.s32.totalorder %s26, 1
      %p259 = por %p257, %p258
      %p261 = scmp.ne.s32.totalorder %s246, %s260
      %p262 = scmp.eq.s32.totalorder %s26, 0
      %p263 = por %p261, %p262
      %s265 = sadd.s32 %s264, 1
      %p268 = scmp.eq.s32.totalorder %s20, 1
      %p269 = scmp.ne.s32.totalorder %s264, %s266
      %p270 = scmp.eq.s32.totalorder %s20, 0
      %p271 = por %p269, %p270
      %p272 = scmp.ne.s32.totalorder %s264, %s266
      %p273 = scmp.eq.s32.totalorder %s25, 1
      %p274 = por %p272, %p273
      %p275 = scmp.ne.s32.totalorder %s266, %s267
      %p276 = scmp.eq.s32.totalorder %s25, 0
      %p277 = por %p275, %p276
      %p278 = scmp.ne.s32.totalorder %s266, %s267
      %p279 = scmp.eq.s32.totalorder %s26, 1
      %p280 = por %p278, %p279
      %p282 = scmp.ne.s32.totalorder %s267, %s281
      %p283 = scmp.eq.s32.totalorder %s26, 0
      %p284 = por %p282, %p283
      %s285 = ssub.s32 %s20, %s27
      %p286 = scmp.eq.s32.totalorder %s285, 0
      %s288 = sadd.s32 %s287, 1
      %s289 = scalar_select %p286, %s287, %s288
      %p292 = pneg %p286
      %p293 = scmp.eq.s32.totalorder %s20, 1
      %p294 = por %p292, %p293
      %p295 = scmp.ne.s32.totalorder %s287, %s290
      %p296 = scmp.eq.s32.totalorder %s20, 0
      %p297 = por %p295, %p296
      %p298 = scmp.ne.s32.totalorder %s287, %s290
      %p299 = scmp.eq.s32.totalorder %s25, 1
      %p300 = por %p298, %p299
      %p301 = scmp.ne.s32.totalorder %s290, %s291
      %p302 = scmp.eq.s32.totalorder %s25, 0
      %p303 = por %p301, %p302
      %p304 = scmp.ne.s32.totalorder %s290, %s291
      %p305 = scmp.eq.s32.totalorder %s26, 1
      %p306 = por %p304, %p305
      %p308 = scmp.ne.s32.totalorder %s291, %s307
      %p309 = scmp.eq.s32.totalorder %s26, 0
      %p310 = por %p308, %p309
      %p311 = scmp.le.s32.totalorder 1, %s20
      %p312 = scmp.lt.s32.totalorder %s20, 3
      %p313 = pnand %p311, %p312
      %p314 = pneg %p313
      // Predicated region
      $region9: #{tpu_custom_call.1} parent=5 // pred_check
        _
      $region10: #{tpu_custom_call.1} parent=5 // pred_check_branch
        %316 = sbr.rel (%p313) target = $region12
      $region11: #{tpu_custom_call.1} parent=5 // pred_region
        %s317 = ssub.s32 %s20, 1
        // Predicated region
        $region13: #{tpu_custom_call.1} parent=11 // pred_check
          %p318 = pneg %p67
        $region14: #{tpu_custom_call.1} parent=11 // pred_check_branch
          %320 = sbr.rel (%p318) target = $region16
        $region15: #{tpu_custom_call.1} parent=11 // pred_region
          _
        $region16: #{tpu_custom_call.1} parent=11 // pred_fallthru
          _
        // Predicated region
        $region17: #{tpu_custom_call.1} parent=11 // pred_check
          %p321 = pneg %p88
        $region18: #{tpu_custom_call.1} parent=11 // pred_check_branch
          %323 = sbr.rel (%p321) target = $region20
        $region19: #{tpu_custom_call.1} parent=11 // pred_region
          _
        $region20: #{tpu_custom_call.1} parent=11 // pred_fallthru
          _
        // Predicated region
        $region21: #{tpu_custom_call.1} parent=11 // pred_check
          %p324 = pneg %p109
        $region22: #{tpu_custom_call.1} parent=11 // pred_check_branch
          %326 = sbr.rel (%p324) target = $region24
        $region23: #{tpu_custom_call.1} parent=11 // pred_region
          _
        $region24: #{tpu_custom_call.1} parent=11 // pred_fallthru
          _
        // Predicated region
        $region25: #{tpu_custom_call.1} parent=11 // pred_check
          %p327 = pneg %p130
        $region26: #{tpu_custom_call.1} parent=11 // pred_check_branch
          %329 = sbr.rel (%p327) target = $region28
        $region27: #{tpu_custom_call.1} parent=11 // pred_region
          _
        $region28: #{tpu_custom_call.1} parent=11 // pred_fallthru
          _
        // Predicated region
        $region29: #{tpu_custom_call.1} parent=11 // pred_check
          %p330 = pneg %p151
        $region30: #{tpu_custom_call.1} parent=11 // pred_check_branch
          %332 = sbr.rel (%p330) target = $region32
        $region31: #{tpu_custom_call.1} parent=11 // pred_region
          _
        $region32: #{tpu_custom_call.1} parent=11 // pred_fallthru
          _
        // Predicated region
        $region33: #{tpu_custom_call.1} parent=11 // pred_check
          %p333 = pneg %p172
        $region34: #{tpu_custom_call.1} parent=11 // pred_check_branch
          %335 = sbr.rel (%p333) target = $region36
        $region35: #{tpu_custom_call.1} parent=11 // pred_region
          %337 = vsyncadd [#allocation3], 0
          %s338 = sshll.u32 %s6, 4
          %s339 = int_to_ptr.hbm [resolvable:$true] %s338
          %s340 = sshll.u32 [#allocation2], 4
          %s341 = int_to_ptr.vmem [resolvable:$true] %s340
          %346 = dma.hbm_to_vmem [thread:$0]  %s339, 14592, %s341, [#allocation3], 384, 384, 24
        $region36: #{tpu_custom_call.1} parent=11 // pred_fallthru
          _
        // Predicated region
        $region37: #{tpu_custom_call.1} parent=11 // pred_check
          %p347 = pneg %p193
        $region38: #{tpu_custom_call.1} parent=11 // pred_check_branch
          %349 = sbr.rel (%p347) target = $region40
        $region39: #{tpu_custom_call.1} parent=11 // pred_region
          _
        $region40: #{tpu_custom_call.1} parent=11 // pred_fallthru
          _
        // Predicated region
        $region41: #{tpu_custom_call.1} parent=11 // pred_check
          %p350 = pneg %p214
        $region42: #{tpu_custom_call.1} parent=11 // pred_check_branch
          %352 = sbr.rel (%p350) target = $region44
        $region43: #{tpu_custom_call.1} parent=11 // pred_region
          %354 = vsyncadd [#allocation5], 0
          %s355 = sshll.u32 %s8, 4
          %s356 = int_to_ptr.hbm [resolvable:$true] %s355
          %s357 = sshll.u32 [#allocation4], 4
          %s358 = int_to_ptr.vmem [resolvable:$true] %s357
          %363 = dma.hbm_to_vmem [thread:$0]  %s356, 14592, %s358, [#allocation5], 384, 384, 24
        $region44: #{tpu_custom_call.1} parent=11 // pred_fallthru
          _
        // Predicated region
        $region45: #{tpu_custom_call.1} parent=11 // pred_check
          %p364 = pneg %p235
        $region46: #{tpu_custom_call.1} parent=11 // pred_check_branch
          %366 = sbr.rel (%p364) target = $region48
        $region47: #{tpu_custom_call.1} parent=11 // pred_region
          _
        $region48: #{tpu_custom_call.1} parent=11 // pred_fallthru
          _
        // Predicated region
        $region49: #{tpu_custom_call.1} parent=11 // pred_check
          %p367 = pneg %p256
        $region50: #{tpu_custom_call.1} parent=11 // pred_check_branch
          %369 = sbr.rel (%p367) target = $region52
        $region51: #{tpu_custom_call.1} parent=11 // pred_region
          _
        $region52: #{tpu_custom_call.1} parent=11 // pred_fallthru
          _
        // Predicated region
        $region53: #{tpu_custom_call.1} parent=11 // pred_check
          %p370 = pneg %p277
        $region54: #{tpu_custom_call.1} parent=11 // pred_check_branch
          %372 = sbr.rel (%p370) target = $region56
        $region55: #{tpu_custom_call.1} parent=11 // pred_region
          _
        $region56: #{tpu_custom_call.1} parent=11 // pred_fallthru
          _
      $region12: #{tpu_custom_call.1} parent=5 // pred_fallthru
        _
      %p373 = scmp.lt.s32.totalorder %s20, 2
      // Predicated region
      $region57: #{tpu_custom_call.1} parent=5 // pred_check
        %p374 = pneg %p373
      $region58: #{tpu_custom_call.1} parent=5 // pred_check_branch
        %376 = sbr.rel (%p374) target = $region60
      $region59: #{tpu_custom_call.1} parent=5 // pred_region
        // Predicated region
        $region61: #{tpu_custom_call.1} parent=59 // pred_check
          %p377 = pneg %p40
        $region62: #{tpu_custom_call.1} parent=59 // pred_check_branch
          %379 = sbr.rel (%p377) target = $region64
        $region63: #{tpu_custom_call.1} parent=59 // pred_region
          %s380 = smul.u32 4, %s20
          %p381 = scmp.lt.s32.totalorder %s380, 7
          %s382 = scalar_select %p381, %s380, 7
          %s383 = smul.addr %s382, 8
          %s384 = scalar_lea.vmem %s0, %s383
          %s385 = smul.u32 4, %s20
        $region64: #{tpu_custom_call.1} parent=59 // pred_fallthru
          _
      $region60: #{tpu_custom_call.1} parent=5 // pred_fallthru
        _
      %p386 = scmp.le.s32.totalorder 1, %s20
      %p387 = scmp.lt.s32.totalorder %s20, 3
      %p388 = pnand %p386, %p387
      %p389 = pneg %p388
      // Predicated region
      $region65: #{tpu_custom_call.1} parent=5 // pred_check
        _
      $region66: #{tpu_custom_call.1} parent=5 // pred_check_branch
        %391 = sbr.rel (%p388) target = $region68
      $region67: #{tpu_custom_call.1} parent=5 // pred_region
        %s392 = ssub.s32 %s20, 1
        // Predicated region
        $region69: #{tpu_custom_call.1} parent=67 // pred_check
          %p393 = pneg %p172
        $region70: #{tpu_custom_call.1} parent=67 // pred_check_branch
          %395 = sbr.rel (%p393) target = $region72
        $region71: #{tpu_custom_call.1} parent=67 // pred_region
          %397 = dma.done [#allocation3], 14592
        $region72: #{tpu_custom_call.1} parent=67 // pred_fallthru
          _
        // Predicated region
        $region73: #{tpu_custom_call.1} parent=67 // pred_check
          %p398 = pneg %p214
        $region74: #{tpu_custom_call.1} parent=67 // pred_check_branch
          %400 = sbr.rel (%p398) target = $region76
        $region75: #{tpu_custom_call.1} parent=67 // pred_region
          %402 = dma.done [#allocation5], 14592
        $region76: #{tpu_custom_call.1} parent=67 // pred_fallthru
          _
        %s403 = smul.u32 4, %s25
        %p404 = scmp.lt.s32.totalorder %s403, 7
        %s405 = scalar_select %p404, %s403, 7
        %s406 = smul.addr %s405, 8
        %s407 = scalar_lea.vmem %s0, %s406
        %p408 = pneg %p46
        %p409 = pneg %p43
        %p410 = pneg %p67
        %p411 = pneg %p64
        %p412 = pneg %p88
        %p413 = pneg %p85
        %p414 = pneg %p109
        %p415 = pneg %p106
        %p416 = pneg %p130
        %p417 = pneg %p127
        %p418 = pneg %p151
        %p419 = pneg %p148
        %p420 = pneg %p172
        %p421 = pneg %p169
        %p422 = pneg %p193
        %p423 = pneg %p190
        %p424 = pneg %p214
        %p425 = pneg %p211
        %p426 = pneg %p235
        %p427 = pneg %p232
        %p428 = pneg %p256
        %p429 = pneg %p253
        %p430 = pneg %p277
        %p431 = pneg %p274
        %p432 = pneg %p303
        %p433 = pneg %p300
        %s434 = smul.u32 4, %s25
        %p435 = scmp.lt.s32.totalorder %s434, 7
        %s436 = scalar_select %p435, %s434, 7
        %s437 = smul.addr %s436, 8
        %s438 = scalar_lea.vmem %s12, %s437
        %s439 = smul.u32 4, %s25
        %p440 = scmp.lt.s32.totalorder %s439, 7
        %s441 = scalar_select %p440, %s439, 7
        %s442 = smul.addr %s441, 8
        %s443 = scalar_lea.vmem %s0, %s442
        %s444 = smul.u32 4, %s25
        %s445 = smul.u32 4, %s25
        %p446 = scmp.lt.s32.totalorder %s445, 7
        %s447 = scalar_select %p446, %s445, 7
        %s448 = smul.addr %s447, 8
        %s449 = scalar_lea.vmem %s12, %s448
        %s450 = smul.u32 4, %s25
        %v451 = vld [vmem:[%s443] sm:$0xff]
        %v452 = vld [vmem:[%s443 + $0x8] sm:$0xff]
        %v453 = vld [vmem:[%s443 + $0x10] sm:$0xff]
        %v454 = vld [vmem:[%s443 + $0x18] sm:$0xff]
        %v455 = vld [vmem:[%s1] sm:$0x7]
        %v456 = vld [vmem:[%s2] sm:$0x1]
        %v458 = vperm.slane %v456, 0
        %vm460 = vcmask 23552
        %v462 = vsel %vm460, %v451, 0
        %v465 = vsel %vm460, %v452, 0
        %v468 = vsel %vm460, %v453, 0
        %v471 = vsel %vm460, %v454, 0
        %vm473 = vcmask 1042432
        %v475 = vsel %vm473, %v455, 0
        %477 = vmatpush.msra.mxu0 0.0
        %478 = vmatpush.msra.mxu0 0.0
        %479 = vmatpush.msra.mxu0 0.0
        %480 = vmatpush.msra.mxu0 0.0
        %481 = vmatpush.msra.mxu0 0.0
        %482 = vmatpush.msra.mxu0 0.0
        %483 = vmatpush.msra.mxu0 0.0
        %484 = vmatpush.msra.mxu0 0.0
        %485 = vmatpush.msra.mxu0 0.0
        %486 = vmatpush.msra.mxu0 0.0
        %487 = vmatpush.msra.mxu0 0.0
        %488 = vmatpush.msra.mxu0 0.0
        %489 = vmatpush.msra.mxu0 0.0
        %490 = vmatpush.msra.mxu0 0.0
        %491 = vmatpush.msra.mxu0 0.0
        %492 = vmatpush.msra.mxu0 %v475
        %493 = vmatmul.f32.gmra.mxu0 %v462
        %v494 = vpop.f32.mrf.mxu0
        %v495 = vadd.f32 %v458, %v494
        %496 = vmatmul.f32.gmra.mxu0 %v465
        %v497 = vpop.f32.mrf.mxu0
        %v498 = vadd.f32 %v458, %v497
        %499 = vmatmul.f32.gmra.mxu0 %v468
        %v500 = vpop.f32.mrf.mxu0
        %v501 = vadd.f32 %v458, %v500
        %502 = vmatmul.f32.gmra.mxu0 %v471
        %v503 = vpop.f32.mrf.mxu0
        %v504 = vadd.f32 %v458, %v503
        %505 = vdwg.mxu0
        %v506 = vmax.f32 %v495, 0.0
        %v507 = vmax.f32 %v498, 0.0
        %v508 = vmax.f32 %v501, 0.0
        %v509 = vmax.f32 %v504, 0.0
        %v510 = vld [vmem:[%s3] sm:$0xff]
        %v511 = vld [vmem:[%s3 + $0x8] sm:$0xff]
        %v512 = vld [vmem:[%s3 + $0x10] sm:$0xff]
        %v513 = vld [vmem:[%s3 + $0x18] sm:$0xff]
        %v514 = vld [vmem:[%s3 + $0x20] sm:$0xff]
        %v515 = vld [vmem:[%s3 + $0x28] sm:$0xff]
        %v516 = vld [vmem:[%s3 + $0x30] sm:$0xff]
        %v517 = vld [vmem:[%s3 + $0x38] sm:$0xff]
        %v518 = vld [vmem:[%s3 + $0x40] sm:$0xff]
        %v519 = vld [vmem:[%s3 + $0x48] sm:$0xff]
        %v520 = vld [vmem:[%s3 + $0x50] sm:$0xff]
        %v521 = vld [vmem:[%s3 + $0x58] sm:$0xff]
        %v522 = vld [vmem:[%s3 + $0x60] sm:$0xff]
        %v523 = vld [vmem:[%s3 + $0x68] sm:$0xff]
        %v524 = vld [vmem:[%s3 + $0x70] sm:$0xff]
        %v525 = vld [vmem:[%s3 + $0x78] sm:$0xff]
        %v526 = vld [vmem:[%s3 + $0x80] sm:$0xff]
        %v527 = vld [vmem:[%s3 + $0x88] sm:$0xff]
        %v528 = vld [vmem:[%s3 + $0x90] sm:$0xff]
        %v529 = vld [vmem:[%s3 + $0x98] sm:$0xff]
        %v530 = vld [vmem:[%s3 + $0xa0] sm:$0xff]
        %v531 = vld [vmem:[%s3 + $0xa8] sm:$0xff]
        %v532 = vld [vmem:[%s3 + $0xb0] sm:$0xff]
        %v533 = vld [vmem:[%s3 + $0xb8] sm:$0xff]
        %v534 = vld [vmem:[%s4] sm:$0xff]
        %v535 = vld [vmem:[%s4 + $0x8] sm:$0xff]
        %v536 = vld [vmem:[%s4 + $0x10] sm:$0xff]
        %v537 = vld [vmem:[%s4 + $0x18] sm:$0xff]
        %v538 = vld [vmem:[%s4 + $0x20] sm:$0xff]
        %v539 = vld [vmem:[%s4 + $0x28] sm:$0xff]
        %540 = vrot.lane.b32.xlu0 %v451, 125
        %v541 = vpop.permute.xlu0 %540
        %542 = vrot.lane.b32.xlu0 %v452, 125
        %v543 = vpop.permute.xlu0 %542
        %544 = vrot.lane.b32.xlu0 %v453, 125
        %v545 = vpop.permute.xlu0 %544
        %546 = vrot.lane.b32.xlu0 %v454, 125
        %v547 = vpop.permute.xlu0 %546
        %vm548 = vcmask 130048
        %v549 = vsel %vm548, %v541, 0
        %v551 = vsel %vm548, %v543, 0
        %v553 = vsel %vm548, %v545, 0
        %v555 = vsel %vm548, %v547, 0
        %557 = vmatpush.msra.mxu0 0.0
        %558 = vmatpush.msra.mxu0 0.0
        %559 = vmatpush.msra.mxu0 0.0
        %560 = vmatpush.msra.mxu0 0.0
        %561 = vmatpush.msra.mxu0 0.0
        %562 = vmatpush.msra.mxu0 0.0
        %563 = vmatpush.msra.mxu0 0.0
        %564 = vmatpush.msra.mxu0 0.0
        %565 = vmatpush.msra.mxu0 0.0
        %566 = vmatpush.msra.mxu0 0.0
        %567 = vmatpush.msra.mxu0 0.0
        %568 = vmatpush.msra.mxu0 0.0
        %569 = vmatpush.msra.mxu0 0.0
        %570 = vmatpush.msra.mxu0 0.0
        %571 = vmatpush.msra.mxu0 %v537
        %572 = vmatpush.msra.mxu0 %v534
        %573 = vmatmul.f32.gmra.mxu0 %v549
        %v574 = vpop.f32.mrf.mxu0
        %v575 = vadd.f32 0.0, %v574
        %576 = vmatmul.f32.gmra.mxu0 %v551
        %v577 = vpop.f32.mrf.mxu0
        %v578 = vadd.f32 0.0, %v577
        %579 = vmatmul.f32.gmra.mxu0 %v553
        %v580 = vpop.f32.mrf.mxu0
        %v581 = vadd.f32 0.0, %v580
        %582 = vmatmul.f32.gmra.mxu0 %v555
        %v583 = vpop.f32.mrf.mxu0
        %v584 = vadd.f32 0.0, %v583
        %585 = vdwg.mxu0
        %586 = vmatpush.msra.mxu0 0.0
        %587 = vmatpush.msra.mxu0 0.0
        %588 = vmatpush.msra.mxu0 0.0
        %589 = vmatpush.msra.mxu0 0.0
        %590 = vmatpush.msra.mxu0 0.0
        %591 = vmatpush.msra.mxu0 0.0
        %592 = vmatpush.msra.mxu0 0.0
        %593 = vmatpush.msra.mxu0 0.0
        %594 = vmatpush.msra.mxu0 0.0
        %595 = vmatpush.msra.mxu0 0.0
        %596 = vmatpush.msra.mxu0 0.0
        %597 = vmatpush.msra.mxu0 0.0
        %598 = vmatpush.msra.mxu0 0.0
        %599 = vmatpush.msra.mxu0 0.0
        %600 = vmatpush.msra.mxu0 %v538
        %601 = vmatpush.msra.mxu0 %v535
        %602 = vmatmul.f32.gmra.mxu0 %v549
        %v603 = vpop.f32.mrf.mxu0
        %v604 = vadd.f32 0.0, %v603
        %605 = vmatmul.f32.gmra.mxu0 %v551
        %v606 = vpop.f32.mrf.mxu0
        %v607 = vadd.f32 0.0, %v606
        %608 = vmatmul.f32.gmra.mxu0 %v553
        %v609 = vpop.f32.mrf.mxu0
        %v610 = vadd.f32 0.0, %v609
        %611 = vmatmul.f32.gmra.mxu0 %v555
        %v612 = vpop.f32.mrf.mxu0
        %v613 = vadd.f32 0.0, %v612
        %614 = vdwg.mxu0
        %615 = vmatpush.msra.mxu0 0.0
        %616 = vmatpush.msra.mxu0 0.0
        %617 = vmatpush.msra.mxu0 0.0
        %618 = vmatpush.msra.mxu0 0.0
        %619 = vmatpush.msra.mxu0 0.0
        %620 = vmatpush.msra.mxu0 0.0
        %621 = vmatpush.msra.mxu0 0.0
        %622 = vmatpush.msra.mxu0 0.0
        %623 = vmatpush.msra.mxu0 0.0
        %624 = vmatpush.msra.mxu0 0.0
        %625 = vmatpush.msra.mxu0 0.0
        %626 = vmatpush.msra.mxu0 0.0
        %627 = vmatpush.msra.mxu0 0.0
        %628 = vmatpush.msra.mxu0 0.0
        %629 = vmatpush.msra.mxu0 %v539
        %630 = vmatpush.msra.mxu0 %v536
        %631 = vmatmul.f32.gmra.mxu0 %v549
        %v632 = vpop.f32.mrf.mxu0
        %v633 = vadd.f32 0.0, %v632
        %634 = vmatmul.f32.gmra.mxu0 %v551
        %v635 = vpop.f32.mrf.mxu0
        %v636 = vadd.f32 0.0, %v635
        %637 = vmatmul.f32.gmra.mxu0 %v553
        %v638 = vpop.f32.mrf.mxu0
        %v639 = vadd.f32 0.0, %v638
        %640 = vmatmul.f32.gmra.mxu0 %v555
        %v641 = vpop.f32.mrf.mxu0
        %v642 = vadd.f32 0.0, %v641
        %643 = vdwg.mxu0
        %vm644 = vcmask 523264
        %v646 = vsel %vm644, %v506, 0
        %v649 = vsel %vm644, %v507, 0
        %v652 = vsel %vm644, %v508, 0
        %v655 = vsel %vm644, %v509, 0
        %657 = vmatpush.msra.mxu0 0.0
        %658 = vmatpush.msra.mxu0 0.0
        %659 = vmatpush.msra.mxu0 0.0
        %660 = vmatpush.msra.mxu0 0.0
        %661 = vmatpush.msra.mxu0 0.0
        %662 = vmatpush.msra.mxu0 0.0
        %663 = vmatpush.msra.mxu0 0.0
        %664 = vmatpush.msra.mxu0 0.0
        %665 = vmatpush.msra.mxu0 %v531
        %666 = vmatpush.msra.mxu0 %v528
        %667 = vmatpush.msra.mxu0 %v525
        %668 = vmatpush.msra.mxu0 %v522
        %669 = vmatpush.msra.mxu0 %v519
        %670 = vmatpush.msra.mxu0 %v516
        %671 = vmatpush.msra.mxu0 %v513
        %672 = vmatpush.msra.mxu0 %v510
        %673 = vmatmul.f32.gmra.mxu0 %v646
        %v674 = vpop.f32.mrf.mxu0
        %v675 = vadd.f32 %v575, %v674
        %676 = vmatmul.f32.gmra.mxu0 %v649
        %v677 = vpop.f32.mrf.mxu0
        %v678 = vadd.f32 %v578, %v677
        %679 = vmatmul.f32.gmra.mxu0 %v652
        %v680 = vpop.f32.mrf.mxu0
        %v681 = vadd.f32 %v581, %v680
        %682 = vmatmul.f32.gmra.mxu0 %v655
        %v683 = vpop.f32.mrf.mxu0
        %v684 = vadd.f32 %v584, %v683
        %685 = vdwg.mxu0
        %686 = vmatpush.msra.mxu0 0.0
        %687 = vmatpush.msra.mxu0 0.0
        %688 = vmatpush.msra.mxu0 0.0
        %689 = vmatpush.msra.mxu0 0.0
        %690 = vmatpush.msra.mxu0 0.0
        %691 = vmatpush.msra.mxu0 0.0
        %692 = vmatpush.msra.mxu0 0.0
        %693 = vmatpush.msra.mxu0 0.0
        %694 = vmatpush.msra.mxu0 %v532
        %695 = vmatpush.msra.mxu0 %v529
        %696 = vmatpush.msra.mxu0 %v526
        %697 = vmatpush.msra.mxu0 %v523
        %698 = vmatpush.msra.mxu0 %v520
        %699 = vmatpush.msra.mxu0 %v517
        %700 = vmatpush.msra.mxu0 %v514
        %701 = vmatpush.msra.mxu0 %v511
        %702 = vmatmul.f32.gmra.mxu0 %v646
        %v703 = vpop.f32.mrf.mxu0
        %v704 = vadd.f32 %v604, %v703
        %705 = vmatmul.f32.gmra.mxu0 %v649
        %v706 = vpop.f32.mrf.mxu0
        %v707 = vadd.f32 %v607, %v706
        %708 = vmatmul.f32.gmra.mxu0 %v652
        %v709 = vpop.f32.mrf.mxu0
        %v710 = vadd.f32 %v610, %v709
        %711 = vmatmul.f32.gmra.mxu0 %v655
        %v712 = vpop.f32.mrf.mxu0
        %v713 = vadd.f32 %v613, %v712
        %714 = vdwg.mxu0
        %715 = vmatpush.msra.mxu0 0.0
        %716 = vmatpush.msra.mxu0 0.0
        %717 = vmatpush.msra.mxu0 0.0
        %718 = vmatpush.msra.mxu0 0.0
        %719 = vmatpush.msra.mxu0 0.0
        %720 = vmatpush.msra.mxu0 0.0
        %721 = vmatpush.msra.mxu0 0.0
        %722 = vmatpush.msra.mxu0 0.0
        %723 = vmatpush.msra.mxu0 %v533
        %724 = vmatpush.msra.mxu0 %v530
        %725 = vmatpush.msra.mxu0 %v527
        %726 = vmatpush.msra.mxu0 %v524
        %727 = vmatpush.msra.mxu0 %v521
        %728 = vmatpush.msra.mxu0 %v518
        %729 = vmatpush.msra.mxu0 %v515
        %730 = vmatpush.msra.mxu0 %v512
        %731 = vmatmul.f32.gmra.mxu0 %v646
        %v732 = vpop.f32.mrf.mxu0
        %v733 = vadd.f32 %v633, %v732
        %734 = vmatmul.f32.gmra.mxu0 %v649
        %v735 = vpop.f32.mrf.mxu0
        %v736 = vadd.f32 %v636, %v735
        %737 = vmatmul.f32.gmra.mxu0 %v652
        %v738 = vpop.f32.mrf.mxu0
        %v739 = vadd.f32 %v639, %v738
        %740 = vmatmul.f32.gmra.mxu0 %v655
        %v741 = vpop.f32.mrf.mxu0
        %v742 = vadd.f32 %v642, %v741
        %743 = vdwg.mxu0
        %v744 = vld [vmem:[%s5] sm:$0x7]
        %v746 = vperm.slane %v744, 0
        %v747 = vperm.slane %v744, 1
        %v748 = vperm.slane %v744, 2
        %v752 = vadd.f32 %v675, %v746
        %v753 = vadd.f32 %v704, %v747
        %v754 = vadd.f32 %v733, %v748
        %v755 = vadd.f32 %v678, %v746
        %v756 = vadd.f32 %v707, %v747
        %v757 = vadd.f32 %v736, %v748
        %v758 = vadd.f32 %v681, %v746
        %v759 = vadd.f32 %v710, %v747
        %v760 = vadd.f32 %v739, %v748
        %v761 = vadd.f32 %v684, %v746
        %v762 = vadd.f32 %v713, %v747
        %v763 = vadd.f32 %v742, %v748
        %v764 = vmax.f32 %v752, 0.0
        %v765 = vmax.f32 %v753, 0.0
        %v766 = vmax.f32 %v754, 0.0
        %v767 = vmax.f32 %v755, 0.0
        %v768 = vmax.f32 %v756, 0.0
        %v769 = vmax.f32 %v757, 0.0
        %v770 = vmax.f32 %v758, 0.0
        %v771 = vmax.f32 %v759, 0.0
        %v772 = vmax.f32 %v760, 0.0
        %v773 = vmax.f32 %v761, 0.0
        %v774 = vmax.f32 %v762, 0.0
        %v775 = vmax.f32 %v763, 0.0
        %v776 = vld [vmem:[#allocation2] sm:$0xff]
        %v777 = vld [vmem:[#allocation2 + $0x8] sm:$0xff]
        %v778 = vld [vmem:[#allocation2 + $0x10] sm:$0xff]
        %v779 = vld [vmem:[#allocation2 + $0x18] sm:$0xff]
        %v780 = vld [vmem:[#allocation2 + $0x20] sm:$0xff]
        %v781 = vld [vmem:[#allocation2 + $0x28] sm:$0xff]
        %v782 = vld [vmem:[#allocation2 + $0x30] sm:$0xff]
        %v783 = vld [vmem:[#allocation2 + $0x38] sm:$0xff]
        %v784 = vld [vmem:[#allocation2 + $0x40] sm:$0xff]
        %v785 = vld [vmem:[#allocation2 + $0x48] sm:$0xff]
        %v786 = vld [vmem:[#allocation2 + $0x50] sm:$0xff]
        %v787 = vld [vmem:[#allocation2 + $0x58] sm:$0xff]
        %v788 = vld [vmem:[#allocation2 + $0x60] sm:$0xff]
        %v789 = vld [vmem:[#allocation2 + $0x68] sm:$0xff]
        %v790 = vld [vmem:[#allocation2 + $0x70] sm:$0xff]
        %v791 = vld [vmem:[#allocation2 + $0x78] sm:$0xff]
        %v792 = vld [vmem:[#allocation2 + $0x80] sm:$0xff]
        %v793 = vld [vmem:[#allocation2 + $0x88] sm:$0xff]
        %v794 = vld [vmem:[#allocation2 + $0x90] sm:$0xff]
        %v795 = vld [vmem:[#allocation2 + $0x98] sm:$0xff]
        %v796 = vld [vmem:[#allocation2 + $0xa0] sm:$0xff]
        %v797 = vld [vmem:[#allocation2 + $0xa8] sm:$0xff]
        %v798 = vld [vmem:[#allocation2 + $0xb0] sm:$0xff]
        %v799 = vld [vmem:[#allocation2 + $0xb8] sm:$0xff]
        %v800 = vld [vmem:[#allocation2 + $0xc0] sm:$0xff]
        %v801 = vld [vmem:[#allocation2 + $0xc8] sm:$0xff]
        %v802 = vld [vmem:[#allocation2 + $0xd0] sm:$0xff]
        %v803 = vld [vmem:[#allocation2 + $0xd8] sm:$0xff]
        %v804 = vld [vmem:[#allocation2 + $0xe0] sm:$0xff]
        %v805 = vld [vmem:[#allocation2 + $0xe8] sm:$0xff]
        %v806 = vld [vmem:[#allocation2 + $0xf0] sm:$0xff]
        %v807 = vld [vmem:[#allocation2 + $0xf8] sm:$0xff]
        %v808 = vld [vmem:[#allocation2 + $0x100] sm:$0xff]
        %v809 = vld [vmem:[#allocation2 + $0x108] sm:$0xff]
        %v810 = vld [vmem:[#allocation2 + $0x110] sm:$0xff]
        %v811 = vld [vmem:[#allocation2 + $0x118] sm:$0xff]
        %v812 = vld [vmem:[#allocation2 + $0x120] sm:$0xff]
        %v813 = vld [vmem:[#allocation2 + $0x128] sm:$0xff]
        %v814 = vld [vmem:[#allocation2 + $0x130] sm:$0xff]
        %v815 = vld [vmem:[#allocation2 + $0x138] sm:$0xff]
        %v816 = vld [vmem:[#allocation2 + $0x140] sm:$0xff]
        %v817 = vld [vmem:[#allocation2 + $0x148] sm:$0xff]
        %v818 = vld [vmem:[#allocation2 + $0x150] sm:$0xff]
        %v819 = vld [vmem:[#allocation2 + $0x158] sm:$0xff]
        %v820 = vld [vmem:[#allocation2 + $0x160] sm:$0xff]
        %v821 = vld [vmem:[#allocation2 + $0x168] sm:$0xff]
        %v822 = vld [vmem:[#allocation2 + $0x170] sm:$0xff]
        %v823 = vld [vmem:[#allocation2 + $0x178] sm:$0xff]
        %v824 = vld [vmem:[#allocation2 + $0x180] sm:$0xff]
        %v825 = vld [vmem:[#allocation2 + $0x188] sm:$0xff]
        %v826 = vld [vmem:[#allocation2 + $0x190] sm:$0xff]
        %v827 = vld [vmem:[#allocation2 + $0x198] sm:$0xff]
        %v828 = vld [vmem:[#allocation2 + $0x1a0] sm:$0xff]
        %v829 = vld [vmem:[#allocation2 + $0x1a8] sm:$0xff]
        %v830 = vld [vmem:[#allocation2 + $0x1b0] sm:$0xff]
        %v831 = vld [vmem:[#allocation2 + $0x1b8] sm:$0xff]
        %v832 = vld [vmem:[#allocation2 + $0x1c0] sm:$0xff]
        %v833 = vld [vmem:[#allocation2 + $0x1c8] sm:$0xff]
        %v834 = vld [vmem:[#allocation2 + $0x1d0] sm:$0xff]
        %v835 = vld [vmem:[#allocation2 + $0x1d8] sm:$0xff]
        %v836 = vld [vmem:[#allocation2 + $0x1e0] sm:$0xff]
        %v837 = vld [vmem:[#allocation2 + $0x1e8] sm:$0xff]
        %v838 = vld [vmem:[#allocation2 + $0x1f0] sm:$0xff]
        %v839 = vld [vmem:[#allocation2 + $0x1f8] sm:$0xff]
        %v840 = vld [vmem:[#allocation2 + $0x200] sm:$0xff]
        %v841 = vld [vmem:[#allocation2 + $0x208] sm:$0xff]
        %v842 = vld [vmem:[#allocation2 + $0x210] sm:$0xff]
        %v843 = vld [vmem:[#allocation2 + $0x218] sm:$0xff]
        %v844 = vld [vmem:[#allocation2 + $0x220] sm:$0xff]
        %v845 = vld [vmem:[#allocation2 + $0x228] sm:$0xff]
        %v846 = vld [vmem:[#allocation2 + $0x230] sm:$0xff]
        %v847 = vld [vmem:[#allocation2 + $0x238] sm:$0xff]
        %v848 = vld [vmem:[#allocation2 + $0x240] sm:$0xff]
        %v849 = vld [vmem:[#allocation2 + $0x248] sm:$0xff]
        %v850 = vld [vmem:[#allocation2 + $0x250] sm:$0xff]
        %v851 = vld [vmem:[#allocation2 + $0x258] sm:$0xff]
        %v852 = vld [vmem:[#allocation2 + $0x260] sm:$0xff]
        %v853 = vld [vmem:[#allocation2 + $0x268] sm:$0xff]
        %v854 = vld [vmem:[#allocation2 + $0x270] sm:$0xff]
        %v855 = vld [vmem:[#allocation2 + $0x278] sm:$0xff]
        %v856 = vld [vmem:[#allocation2 + $0x280] sm:$0xff]
        %v857 = vld [vmem:[#allocation2 + $0x288] sm:$0xff]
        %v858 = vld [vmem:[#allocation2 + $0x290] sm:$0xff]
        %v859 = vld [vmem:[#allocation2 + $0x298] sm:$0xff]
        %v860 = vld [vmem:[#allocation2 + $0x2a0] sm:$0xff]
        %v861 = vld [vmem:[#allocation2 + $0x2a8] sm:$0xff]
        %v862 = vld [vmem:[#allocation2 + $0x2b0] sm:$0xff]
        %v863 = vld [vmem:[#allocation2 + $0x2b8] sm:$0xff]
        %v864 = vld [vmem:[#allocation2 + $0x2c0] sm:$0xff]
        %v865 = vld [vmem:[#allocation2 + $0x2c8] sm:$0xff]
        %v866 = vld [vmem:[#allocation2 + $0x2d0] sm:$0xff]
        %v867 = vld [vmem:[#allocation2 + $0x2d8] sm:$0xff]
        %v868 = vld [vmem:[#allocation2 + $0x2e0] sm:$0xff]
        %v869 = vld [vmem:[#allocation2 + $0x2e8] sm:$0xff]
        %v870 = vld [vmem:[#allocation2 + $0x2f0] sm:$0xff]
        %v871 = vld [vmem:[#allocation2 + $0x2f8] sm:$0xff]
        %v872 = vld [vmem:[#allocation2 + $0x300] sm:$0xff]
        %v873 = vld [vmem:[#allocation2 + $0x308] sm:$0xff]
        %v874 = vld [vmem:[#allocation2 + $0x310] sm:$0xff]
        %v875 = vld [vmem:[#allocation2 + $0x318] sm:$0xff]
        %v876 = vld [vmem:[#allocation2 + $0x320] sm:$0xff]
        %v877 = vld [vmem:[#allocation2 + $0x328] sm:$0xff]
        %v878 = vld [vmem:[#allocation2 + $0x330] sm:$0xff]
        %v879 = vld [vmem:[#allocation2 + $0x338] sm:$0xff]
        %v880 = vld [vmem:[#allocation2 + $0x340] sm:$0xff]
        %v881 = vld [vmem:[#allocation2 + $0x348] sm:$0xff]
        %v882 = vld [vmem:[#allocation2 + $0x350] sm:$0xff]
        %v883 = vld [vmem:[#allocation2 + $0x358] sm:$0xff]
        %v884 = vld [vmem:[#allocation2 + $0x360] sm:$0xff]
        %v885 = vld [vmem:[#allocation2 + $0x368] sm:$0xff]
        %v886 = vld [vmem:[#allocation2 + $0x370] sm:$0xff]
        %v887 = vld [vmem:[#allocation2 + $0x378] sm:$0xf]
        %v888 = vld [vmem:[#allocation2 + $0x380] sm:$0xf]
        %v889 = vld [vmem:[#allocation2 + $0x388] sm:$0xf]
        %v890 = vld [vmem:[%s7] sm:$0x7]
        %v892 = vperm.slane %v890, 0
        %v893 = vperm.slane %v890, 1
        %v894 = vperm.slane %v890, 2
        %vm898 = vcmask 359424
        %v900 = vsel %vm898, %v766, 0
        %v903 = vsel %vm898, %v769, 0
        %v906 = vsel %vm898, %v772, 0
        %v909 = vsel %vm898, %v775, 0
        %vm911 = vcmask 1043456
        %v913 = vsel %vm911, %v887, 0
        %v916 = vsel %vm911, %v888, 0
        %v919 = vsel %vm911, %v889, 0
        %921 = vmatpush.msra.mxu0 %v821
        %922 = vmatpush.msra.mxu0 %v818
        %923 = vmatpush.msra.mxu0 %v815
        %924 = vmatpush.msra.mxu0 %v812
        %925 = vmatpush.msra.mxu0 %v809
        %926 = vmatpush.msra.mxu0 %v806
        %927 = vmatpush.msra.mxu0 %v803
        %928 = vmatpush.msra.mxu0 %v800
        %929 = vmatpush.msra.mxu0 %v797
        %930 = vmatpush.msra.mxu0 %v794
        %931 = vmatpush.msra.mxu0 %v791
        %932 = vmatpush.msra.mxu0 %v788
        %933 = vmatpush.msra.mxu0 %v785
        %934 = vmatpush.msra.mxu0 %v782
        %935 = vmatpush.msra.mxu0 %v779
        %936 = vmatpush.msra.mxu0 %v776
        %937 = vmatmul.f32.gmra.mxu0 %v764
        %v938 = vpop.f32.mrf.mxu0
        %v939 = vadd.f32 %v892, %v938
        %940 = vmatmul.f32.gmra.mxu0 %v767
        %v941 = vpop.f32.mrf.mxu0
        %v942 = vadd.f32 %v892, %v941
        %943 = vmatmul.f32.gmra.mxu0 %v770
        %v944 = vpop.f32.mrf.mxu0
        %v945 = vadd.f32 %v892, %v944
        %946 = vmatmul.f32.gmra.mxu0 %v773
        %v947 = vpop.f32.mrf.mxu0
        %v948 = vadd.f32 %v892, %v947
        %949 = vdwg.mxu0
        %950 = vmatpush.msra.mxu0 %v869
        %951 = vmatpush.msra.mxu0 %v866
        %952 = vmatpush.msra.mxu0 %v863
        %953 = vmatpush.msra.mxu0 %v860
        %954 = vmatpush.msra.mxu0 %v857
        %955 = vmatpush.msra.mxu0 %v854
        %956 = vmatpush.msra.mxu0 %v851
        %957 = vmatpush.msra.mxu0 %v848
        %958 = vmatpush.msra.mxu0 %v845
        %959 = vmatpush.msra.mxu0 %v842
        %960 = vmatpush.msra.mxu0 %v839
        %961 = vmatpush.msra.mxu0 %v836
        %962 = vmatpush.msra.mxu0 %v833
        %963 = vmatpush.msra.mxu0 %v830
        %964 = vmatpush.msra.mxu0 %v827
        %965 = vmatpush.msra.mxu0 %v824
        %966 = vmatmul.f32.gmra.mxu0 %v765
        %v967 = vpop.f32.mrf.mxu0
        %v968 = vadd.f32 %v939, %v967
        %969 = vmatmul.f32.gmra.mxu0 %v768
        %v970 = vpop.f32.mrf.mxu0
        %v971 = vadd.f32 %v942, %v970
        %972 = vmatmul.f32.gmra.mxu0 %v771
        %v973 = vpop.f32.mrf.mxu0
        %v974 = vadd.f32 %v945, %v973
        %975 = vmatmul.f32.gmra.mxu0 %v774
        %v976 = vpop.f32.mrf.mxu0
        %v977 = vadd.f32 %v948, %v976
        %978 = vdwg.mxu0
        %979 = vmatpush.msra.mxu0 0.0
        %980 = vmatpush.msra.mxu0 0.0
        %981 = vmatpush.msra.mxu0 0.0
        %982 = vmatpush.msra.mxu0 0.0
        %983 = vmatpush.msra.mxu0 0.0
        %984 = vmatpush.msra.mxu0 0.0
        %985 = vmatpush.msra.mxu0 0.0
        %986 = vmatpush.msra.mxu0 0.0
        %987 = vmatpush.msra.mxu0 0.0
        %988 = vmatpush.msra.mxu0 0.0
        %989 = vmatpush.msra.mxu0 %v913
        %990 = vmatpush.msra.mxu0 %v884
        %991 = vmatpush.msra.mxu0 %v881
        %992 = vmatpush.msra.mxu0 %v878
        %993 = vmatpush.msra.mxu0 %v875
        %994 = vmatpush.msra.mxu0 %v872
        %995 = vmatmul.f32.gmra.mxu0 %v900
        %v996 = vpop.f32.mrf.mxu0
        %v997 = vadd.f32 %v968, %v996
        %998 = vmatmul.f32.gmra.mxu0 %v903
        %v999 = vpop.f32.mrf.mxu0
        %v1000 = vadd.f32 %v971, %v999
        %1001 = vmatmul.f32.gmra.mxu0 %v906
        %v1002 = vpop.f32.mrf.mxu0
        %v1003 = vadd.f32 %v974, %v1002
        %1004 = vmatmul.f32.gmra.mxu0 %v909
        %v1005 = vpop.f32.mrf.mxu0
        %v1006 = vadd.f32 %v977, %v1005
        %1007 = vdwg.mxu0
        %1008 = vmatpush.msra.mxu0 %v822
        %1009 = vmatpush.msra.mxu0 %v819
        %1010 = vmatpush.msra.mxu0 %v816
        %1011 = vmatpush.msra.mxu0 %v813
        %1012 = vmatpush.msra.mxu0 %v810
        %1013 = vmatpush.msra.mxu0 %v807
        %1014 = vmatpush.msra.mxu0 %v804
        %1015 = vmatpush.msra.mxu0 %v801
        %1016 = vmatpush.msra.mxu0 %v798
        %1017 = vmatpush.msra.mxu0 %v795
        %1018 = vmatpush.msra.mxu0 %v792
        %1019 = vmatpush.msra.mxu0 %v789
        %1020 = vmatpush.msra.mxu0 %v786
        %1021 = vmatpush.msra.mxu0 %v783
        %1022 = vmatpush.msra.mxu0 %v780
        %1023 = vmatpush.msra.mxu0 %v777
        %1024 = vmatmul.f32.gmra.mxu0 %v764
        %v1025 = vpop.f32.mrf.mxu0
        %v1026 = vadd.f32 %v893, %v1025
        %1027 = vmatmul.f32.gmra.mxu0 %v767
        %v1028 = vpop.f32.mrf.mxu0
        %v1029 = vadd.f32 %v893, %v1028
        %1030 = vmatmul.f32.gmra.mxu0 %v770
        %v1031 = vpop.f32.mrf.mxu0
        %v1032 = vadd.f32 %v893, %v1031
        %1033 = vmatmul.f32.gmra.mxu0 %v773
        %v1034 = vpop.f32.mrf.mxu0
        %v1035 = vadd.f32 %v893, %v1034
        %1036 = vdwg.mxu0
        %1037 = vmatpush.msra.mxu0 %v870
        %1038 = vmatpush.msra.mxu0 %v867
        %1039 = vmatpush.msra.mxu0 %v864
        %1040 = vmatpush.msra.mxu0 %v861
        %1041 = vmatpush.msra.mxu0 %v858
        %1042 = vmatpush.msra.mxu0 %v855
        %1043 = vmatpush.msra.mxu0 %v852
        %1044 = vmatpush.msra.mxu0 %v849
        %1045 = vmatpush.msra.mxu0 %v846
        %1046 = vmatpush.msra.mxu0 %v843
        %1047 = vmatpush.msra.mxu0 %v840
        %1048 = vmatpush.msra.mxu0 %v837
        %1049 = vmatpush.msra.mxu0 %v834
        %1050 = vmatpush.msra.mxu0 %v831
        %1051 = vmatpush.msra.mxu0 %v828
        %1052 = vmatpush.msra.mxu0 %v825
        %1053 = vmatmul.f32.gmra.mxu0 %v765
        %v1054 = vpop.f32.mrf.mxu0
        %v1055 = vadd.f32 %v1026, %v1054
        %1056 = vmatmul.f32.gmra.mxu0 %v768
        %v1057 = vpop.f32.mrf.mxu0
        %v1058 = vadd.f32 %v1029, %v1057
        %1059 = vmatmul.f32.gmra.mxu0 %v771
        %v1060 = vpop.f32.mrf.mxu0
        %v1061 = vadd.f32 %v1032, %v1060
        %1062 = vmatmul.f32.gmra.mxu0 %v774
        %v1063 = vpop.f32.mrf.mxu0
        %v1064 = vadd.f32 %v1035, %v1063
        %1065 = vdwg.mxu0
        %1066 = vmatpush.msra.mxu0 0.0
        %1067 = vmatpush.msra.mxu0 0.0
        %1068 = vmatpush.msra.mxu0 0.0
        %1069 = vmatpush.msra.mxu0 0.0
        %1070 = vmatpush.msra.mxu0 0.0
        %1071 = vmatpush.msra.mxu0 0.0
        %1072 = vmatpush.msra.mxu0 0.0
        %1073 = vmatpush.msra.mxu0 0.0
        %1074 = vmatpush.msra.mxu0 0.0
        %1075 = vmatpush.msra.mxu0 0.0
        %1076 = vmatpush.msra.mxu0 %v916
        %1077 = vmatpush.msra.mxu0 %v885
        %1078 = vmatpush.msra.mxu0 %v882
        %1079 = vmatpush.msra.mxu0 %v879
        %1080 = vmatpush.msra.mxu0 %v876
        %1081 = vmatpush.msra.mxu0 %v873
        %1082 = vmatmul.f32.gmra.mxu0 %v900
        %v1083 = vpop.f32.mrf.mxu0
        %v1084 = vadd.f32 %v1055, %v1083
        %1085 = vmatmul.f32.gmra.mxu0 %v903
        %v1086 = vpop.f32.mrf.mxu0
        %v1087 = vadd.f32 %v1058, %v1086
        %1088 = vmatmul.f32.gmra.mxu0 %v906
        %v1089 = vpop.f32.mrf.mxu0
        %v1090 = vadd.f32 %v1061, %v1089
        %1091 = vmatmul.f32.gmra.mxu0 %v909
        %v1092 = vpop.f32.mrf.mxu0
        %v1093 = vadd.f32 %v1064, %v1092
        %1094 = vdwg.mxu0
        %1095 = vmatpush.msra.mxu0 %v823
        %1096 = vmatpush.msra.mxu0 %v820
        %1097 = vmatpush.msra.mxu0 %v817
        %1098 = vmatpush.msra.mxu0 %v814
        %1099 = vmatpush.msra.mxu0 %v811
        %1100 = vmatpush.msra.mxu0 %v808
        %1101 = vmatpush.msra.mxu0 %v805
        %1102 = vmatpush.msra.mxu0 %v802
        %1103 = vmatpush.msra.mxu0 %v799
        %1104 = vmatpush.msra.mxu0 %v796
        %1105 = vmatpush.msra.mxu0 %v793
        %1106 = vmatpush.msra.mxu0 %v790
        %1107 = vmatpush.msra.mxu0 %v787
        %1108 = vmatpush.msra.mxu0 %v784
        %1109 = vmatpush.msra.mxu0 %v781
        %1110 = vmatpush.msra.mxu0 %v778
        %1111 = vmatmul.f32.gmra.mxu0 %v764
        %v1112 = vpop.f32.mrf.mxu0
        %v1113 = vadd.f32 %v894, %v1112
        %1114 = vmatmul.f32.gmra.mxu0 %v767
        %v1115 = vpop.f32.mrf.mxu0
        %v1116 = vadd.f32 %v894, %v1115
        %1117 = vmatmul.f32.gmra.mxu0 %v770
        %v1118 = vpop.f32.mrf.mxu0
        %v1119 = vadd.f32 %v894, %v1118
        %1120 = vmatmul.f32.gmra.mxu0 %v773
        %v1121 = vpop.f32.mrf.mxu0
        %v1122 = vadd.f32 %v894, %v1121
        %1123 = vdwg.mxu0
        %1124 = vmatpush.msra.mxu0 %v871
        %1125 = vmatpush.msra.mxu0 %v868
        %1126 = vmatpush.msra.mxu0 %v865
        %1127 = vmatpush.msra.mxu0 %v862
        %1128 = vmatpush.msra.mxu0 %v859
        %1129 = vmatpush.msra.mxu0 %v856
        %1130 = vmatpush.msra.mxu0 %v853
        %1131 = vmatpush.msra.mxu0 %v850
        %1132 = vmatpush.msra.mxu0 %v847
        %1133 = vmatpush.msra.mxu0 %v844
        %1134 = vmatpush.msra.mxu0 %v841
        %1135 = vmatpush.msra.mxu0 %v838
        %1136 = vmatpush.msra.mxu0 %v835
        %1137 = vmatpush.msra.mxu0 %v832
        %1138 = vmatpush.msra.mxu0 %v829
        %1139 = vmatpush.msra.mxu0 %v826
        %1140 = vmatmul.f32.gmra.mxu0 %v765
        %v1141 = vpop.f32.mrf.mxu0
        %v1142 = vadd.f32 %v1113, %v1141
        %1143 = vmatmul.f32.gmra.mxu0 %v768
        %v1144 = vpop.f32.mrf.mxu0
        %v1145 = vadd.f32 %v1116, %v1144
        %1146 = vmatmul.f32.gmra.mxu0 %v771
        %v1147 = vpop.f32.mrf.mxu0
        %v1148 = vadd.f32 %v1119, %v1147
        %1149 = vmatmul.f32.gmra.mxu0 %v774
        %v1150 = vpop.f32.mrf.mxu0
        %v1151 = vadd.f32 %v1122, %v1150
        %1152 = vdwg.mxu0
        %1153 = vmatpush.msra.mxu0 0.0
        %1154 = vmatpush.msra.mxu0 0.0
        %1155 = vmatpush.msra.mxu0 0.0
        %1156 = vmatpush.msra.mxu0 0.0
        %1157 = vmatpush.msra.mxu0 0.0
        %1158 = vmatpush.msra.mxu0 0.0
        %1159 = vmatpush.msra.mxu0 0.0
        %1160 = vmatpush.msra.mxu0 0.0
        %1161 = vmatpush.msra.mxu0 0.0
        %1162 = vmatpush.msra.mxu0 0.0
        %1163 = vmatpush.msra.mxu0 %v919
        %1164 = vmatpush.msra.mxu0 %v886
        %1165 = vmatpush.msra.mxu0 %v883
        %1166 = vmatpush.msra.mxu0 %v880
        %1167 = vmatpush.msra.mxu0 %v877
        %1168 = vmatpush.msra.mxu0 %v874
        %1169 = vmatmul.f32.gmra.mxu0 %v900
        %v1170 = vpop.f32.mrf.mxu0
        %v1171 = vadd.f32 %v1142, %v1170
        %1172 = vmatmul.f32.gmra.mxu0 %v903
        %v1173 = vpop.f32.mrf.mxu0
        %v1174 = vadd.f32 %v1145, %v1173
        %1175 = vmatmul.f32.gmra.mxu0 %v906
        %v1176 = vpop.f32.mrf.mxu0
        %v1177 = vadd.f32 %v1148, %v1176
        %1178 = vmatmul.f32.gmra.mxu0 %v909
        %v1179 = vpop.f32.mrf.mxu0
        %v1180 = vadd.f32 %v1151, %v1179
        %1181 = vdwg.mxu0
        %v1182 = vmax.f32 %v997, 0.0
        %v1183 = vmax.f32 %v1084, 0.0
        %v1184 = vmax.f32 %v1171, 0.0
        %v1185 = vmax.f32 %v1000, 0.0
        %v1186 = vmax.f32 %v1087, 0.0
        %v1187 = vmax.f32 %v1174, 0.0
        %v1188 = vmax.f32 %v1003, 0.0
        %v1189 = vmax.f32 %v1090, 0.0
        %v1190 = vmax.f32 %v1177, 0.0
        %v1191 = vmax.f32 %v1006, 0.0
        %v1192 = vmax.f32 %v1093, 0.0
        %v1193 = vmax.f32 %v1180, 0.0
        %v1194 = vld [vmem:[#allocation4] sm:$0xff]
        %v1195 = vld [vmem:[#allocation4 + $0x8] sm:$0xff]
        %v1196 = vld [vmem:[#allocation4 + $0x10] sm:$0xff]
        %v1197 = vld [vmem:[#allocation4 + $0x18] sm:$0xff]
        %v1198 = vld [vmem:[#allocation4 + $0x20] sm:$0xff]
        %v1199 = vld [vmem:[#allocation4 + $0x28] sm:$0xff]
        %v1200 = vld [vmem:[#allocation4 + $0x30] sm:$0xff]
        %v1201 = vld [vmem:[#allocation4 + $0x38] sm:$0xff]
        %v1202 = vld [vmem:[#allocation4 + $0x40] sm:$0xff]
        %v1203 = vld [vmem:[#allocation4 + $0x48] sm:$0xff]
        %v1204 = vld [vmem:[#allocation4 + $0x50] sm:$0xff]
        %v1205 = vld [vmem:[#allocation4 + $0x58] sm:$0xff]
        %v1206 = vld [vmem:[#allocation4 + $0x60] sm:$0xff]
        %v1207 = vld [vmem:[#allocation4 + $0x68] sm:$0xff]
        %v1208 = vld [vmem:[#allocation4 + $0x70] sm:$0xff]
        %v1209 = vld [vmem:[#allocation4 + $0x78] sm:$0xff]
        %v1210 = vld [vmem:[#allocation4 + $0x80] sm:$0xff]
        %v1211 = vld [vmem:[#allocation4 + $0x88] sm:$0xff]
        %v1212 = vld [vmem:[#allocation4 + $0x90] sm:$0xff]
        %v1213 = vld [vmem:[#allocation4 + $0x98] sm:$0xff]
        %v1214 = vld [vmem:[#allocation4 + $0xa0] sm:$0xff]
        %v1215 = vld [vmem:[#allocation4 + $0xa8] sm:$0xff]
        %v1216 = vld [vmem:[#allocation4 + $0xb0] sm:$0xff]
        %v1217 = vld [vmem:[#allocation4 + $0xb8] sm:$0xff]
        %v1218 = vld [vmem:[#allocation4 + $0xc0] sm:$0xff]
        %v1219 = vld [vmem:[#allocation4 + $0xc8] sm:$0xff]
        %v1220 = vld [vmem:[#allocation4 + $0xd0] sm:$0xff]
        %v1221 = vld [vmem:[#allocation4 + $0xd8] sm:$0xff]
        %v1222 = vld [vmem:[#allocation4 + $0xe0] sm:$0xff]
        %v1223 = vld [vmem:[#allocation4 + $0xe8] sm:$0xff]
        %v1224 = vld [vmem:[#allocation4 + $0xf0] sm:$0xff]
        %v1225 = vld [vmem:[#allocation4 + $0xf8] sm:$0xff]
        %v1226 = vld [vmem:[#allocation4 + $0x100] sm:$0xff]
        %v1227 = vld [vmem:[#allocation4 + $0x108] sm:$0xff]
        %v1228 = vld [vmem:[#allocation4 + $0x110] sm:$0xff]
        %v1229 = vld [vmem:[#allocation4 + $0x118] sm:$0xff]
        %v1230 = vld [vmem:[#allocation4 + $0x120] sm:$0xff]
        %v1231 = vld [vmem:[#allocation4 + $0x128] sm:$0xff]
        %v1232 = vld [vmem:[#allocation4 + $0x130] sm:$0xff]
        %v1233 = vld [vmem:[#allocation4 + $0x138] sm:$0xff]
        %v1234 = vld [vmem:[#allocation4 + $0x140] sm:$0xff]
        %v1235 = vld [vmem:[#allocation4 + $0x148] sm:$0xff]
        %v1236 = vld [vmem:[#allocation4 + $0x150] sm:$0xff]
        %v1237 = vld [vmem:[#allocation4 + $0x158] sm:$0xff]
        %v1238 = vld [vmem:[#allocation4 + $0x160] sm:$0xff]
        %v1239 = vld [vmem:[#allocation4 + $0x168] sm:$0xff]
        %v1240 = vld [vmem:[#allocation4 + $0x170] sm:$0xff]
        %v1241 = vld [vmem:[#allocation4 + $0x178] sm:$0xff]
        %v1242 = vld [vmem:[#allocation4 + $0x180] sm:$0xff]
        %v1243 = vld [vmem:[#allocation4 + $0x188] sm:$0xff]
        %v1244 = vld [vmem:[#allocation4 + $0x190] sm:$0xff]
        %v1245 = vld [vmem:[#allocation4 + $0x198] sm:$0xff]
        %v1246 = vld [vmem:[#allocation4 + $0x1a0] sm:$0xff]
        %v1247 = vld [vmem:[#allocation4 + $0x1a8] sm:$0xff]
        %v1248 = vld [vmem:[#allocation4 + $0x1b0] sm:$0xff]
        %v1249 = vld [vmem:[#allocation4 + $0x1b8] sm:$0xff]
        %v1250 = vld [vmem:[#allocation4 + $0x1c0] sm:$0xff]
        %v1251 = vld [vmem:[#allocation4 + $0x1c8] sm:$0xff]
        %v1252 = vld [vmem:[#allocation4 + $0x1d0] sm:$0xff]
        %v1253 = vld [vmem:[#allocation4 + $0x1d8] sm:$0xff]
        %v1254 = vld [vmem:[#allocation4 + $0x1e0] sm:$0xff]
        %v1255 = vld [vmem:[#allocation4 + $0x1e8] sm:$0xff]
        %v1256 = vld [vmem:[#allocation4 + $0x1f0] sm:$0xff]
        %v1257 = vld [vmem:[#allocation4 + $0x1f8] sm:$0xff]
        %v1258 = vld [vmem:[#allocation4 + $0x200] sm:$0xff]
        %v1259 = vld [vmem:[#allocation4 + $0x208] sm:$0xff]
        %v1260 = vld [vmem:[#allocation4 + $0x210] sm:$0xff]
        %v1261 = vld [vmem:[#allocation4 + $0x218] sm:$0xff]
        %v1262 = vld [vmem:[#allocation4 + $0x220] sm:$0xff]
        %v1263 = vld [vmem:[#allocation4 + $0x228] sm:$0xff]
        %v1264 = vld [vmem:[#allocation4 + $0x230] sm:$0xff]
        %v1265 = vld [vmem:[#allocation4 + $0x238] sm:$0xff]
        %v1266 = vld [vmem:[#allocation4 + $0x240] sm:$0xff]
        %v1267 = vld [vmem:[#allocation4 + $0x248] sm:$0xff]
        %v1268 = vld [vmem:[#allocation4 + $0x250] sm:$0xff]
        %v1269 = vld [vmem:[#allocation4 + $0x258] sm:$0xff]
        %v1270 = vld [vmem:[#allocation4 + $0x260] sm:$0xff]
        %v1271 = vld [vmem:[#allocation4 + $0x268] sm:$0xff]
        %v1272 = vld [vmem:[#allocation4 + $0x270] sm:$0xff]
        %v1273 = vld [vmem:[#allocation4 + $0x278] sm:$0xff]
        %v1274 = vld [vmem:[#allocation4 + $0x280] sm:$0xff]
        %v1275 = vld [vmem:[#allocation4 + $0x288] sm:$0xff]
        %v1276 = vld [vmem:[#allocation4 + $0x290] sm:$0xff]
        %v1277 = vld [vmem:[#allocation4 + $0x298] sm:$0xff]
        %v1278 = vld [vmem:[#allocation4 + $0x2a0] sm:$0xff]
        %v1279 = vld [vmem:[#allocation4 + $0x2a8] sm:$0xff]
        %v1280 = vld [vmem:[#allocation4 + $0x2b0] sm:$0xff]
        %v1281 = vld [vmem:[#allocation4 + $0x2b8] sm:$0xff]
        %v1282 = vld [vmem:[#allocation4 + $0x2c0] sm:$0xff]
        %v1283 = vld [vmem:[#allocation4 + $0x2c8] sm:$0xff]
        %v1284 = vld [vmem:[#allocation4 + $0x2d0] sm:$0xff]
        %v1285 = vld [vmem:[#allocation4 + $0x2d8] sm:$0xff]
        %v1286 = vld [vmem:[#allocation4 + $0x2e0] sm:$0xff]
        %v1287 = vld [vmem:[#allocation4 + $0x2e8] sm:$0xff]
        %v1288 = vld [vmem:[#allocation4 + $0x2f0] sm:$0xff]
        %v1289 = vld [vmem:[#allocation4 + $0x2f8] sm:$0xff]
        %v1290 = vld [vmem:[#allocation4 + $0x300] sm:$0xff]
        %v1291 = vld [vmem:[#allocation4 + $0x308] sm:$0xff]
        %v1292 = vld [vmem:[#allocation4 + $0x310] sm:$0xff]
        %v1293 = vld [vmem:[#allocation4 + $0x318] sm:$0xff]
        %v1294 = vld [vmem:[#allocation4 + $0x320] sm:$0xff]
        %v1295 = vld [vmem:[#allocation4 + $0x328] sm:$0xff]
        %v1296 = vld [vmem:[#allocation4 + $0x330] sm:$0xff]
        %v1297 = vld [vmem:[#allocation4 + $0x338] sm:$0xff]
        %v1298 = vld [vmem:[#allocation4 + $0x340] sm:$0xff]
        %v1299 = vld [vmem:[#allocation4 + $0x348] sm:$0xff]
        %v1300 = vld [vmem:[#allocation4 + $0x350] sm:$0xff]
        %v1301 = vld [vmem:[#allocation4 + $0x358] sm:$0xff]
        %v1302 = vld [vmem:[#allocation4 + $0x360] sm:$0xff]
        %v1303 = vld [vmem:[#allocation4 + $0x368] sm:$0xff]
        %v1304 = vld [vmem:[#allocation4 + $0x370] sm:$0xff]
        %v1305 = vld [vmem:[#allocation4 + $0x378] sm:$0xf]
        %v1306 = vld [vmem:[#allocation4 + $0x380] sm:$0xf]
        %v1307 = vld [vmem:[#allocation4 + $0x388] sm:$0xf]
        %v1308 = vld [vmem:[%s9] sm:$0x7]
        %v1310 = vperm.slane %v1308, 0
        %v1311 = vperm.slane %v1308, 1
        %v1312 = vperm.slane %v1308, 2
        %v1317 = vsel %vm898, %v1184, 0
        %v1320 = vsel %vm898, %v1187, 0
        %v1323 = vsel %vm898, %v1190, 0
        %v1326 = vsel %vm898, %v1193, 0
        %v1329 = vsel %vm911, %v1305, 0
        %v1332 = vsel %vm911, %v1306, 0
        %v1335 = vsel %vm911, %v1307, 0
        %1337 = vmatpush.msra.mxu0 %v1239
        %1338 = vmatpush.msra.mxu0 %v1236
        %1339 = vmatpush.msra.mxu0 %v1233
        %1340 = vmatpush.msra.mxu0 %v1230
        %1341 = vmatpush.msra.mxu0 %v1227
        %1342 = vmatpush.msra.mxu0 %v1224
        %1343 = vmatpush.msra.mxu0 %v1221
        %1344 = vmatpush.msra.mxu0 %v1218
        %1345 = vmatpush.msra.mxu0 %v1215
        %1346 = vmatpush.msra.mxu0 %v1212
        %1347 = vmatpush.msra.mxu0 %v1209
        %1348 = vmatpush.msra.mxu0 %v1206
        %1349 = vmatpush.msra.mxu0 %v1203
        %1350 = vmatpush.msra.mxu0 %v1200
        %1351 = vmatpush.msra.mxu0 %v1197
        %1352 = vmatpush.msra.mxu0 %v1194
        %1353 = vmatmul.f32.gmra.mxu0 %v1182
        %v1354 = vpop.f32.mrf.mxu0
        %v1355 = vadd.f32 %v1310, %v1354
        %1356 = vmatmul.f32.gmra.mxu0 %v1185
        %v1357 = vpop.f32.mrf.mxu0
        %v1358 = vadd.f32 %v1310, %v1357
        %1359 = vmatmul.f32.gmra.mxu0 %v1188
        %v1360 = vpop.f32.mrf.mxu0
        %v1361 = vadd.f32 %v1310, %v1360
        %1362 = vmatmul.f32.gmra.mxu0 %v1191
        %v1363 = vpop.f32.mrf.mxu0
        %v1364 = vadd.f32 %v1310, %v1363
        %1365 = vdwg.mxu0
        %1366 = vmatpush.msra.mxu0 %v1287
        %1367 = vmatpush.msra.mxu0 %v1284
        %1368 = vmatpush.msra.mxu0 %v1281
        %1369 = vmatpush.msra.mxu0 %v1278
        %1370 = vmatpush.msra.mxu0 %v1275
        %1371 = vmatpush.msra.mxu0 %v1272
        %1372 = vmatpush.msra.mxu0 %v1269
        %1373 = vmatpush.msra.mxu0 %v1266
        %1374 = vmatpush.msra.mxu0 %v1263
        %1375 = vmatpush.msra.mxu0 %v1260
        %1376 = vmatpush.msra.mxu0 %v1257
        %1377 = vmatpush.msra.mxu0 %v1254
        %1378 = vmatpush.msra.mxu0 %v1251
        %1379 = vmatpush.msra.mxu0 %v1248
        %1380 = vmatpush.msra.mxu0 %v1245
        %1381 = vmatpush.msra.mxu0 %v1242
        %1382 = vmatmul.f32.gmra.mxu0 %v1183
        %v1383 = vpop.f32.mrf.mxu0
        %v1384 = vadd.f32 %v1355, %v1383
        %1385 = vmatmul.f32.gmra.mxu0 %v1186
        %v1386 = vpop.f32.mrf.mxu0
        %v1387 = vadd.f32 %v1358, %v1386
        %1388 = vmatmul.f32.gmra.mxu0 %v1189
        %v1389 = vpop.f32.mrf.mxu0
        %v1390 = vadd.f32 %v1361, %v1389
        %1391 = vmatmul.f32.gmra.mxu0 %v1192
        %v1392 = vpop.f32.mrf.mxu0
        %v1393 = vadd.f32 %v1364, %v1392
        %1394 = vdwg.mxu0
        %1395 = vmatpush.msra.mxu0 0.0
        %1396 = vmatpush.msra.mxu0 0.0
        %1397 = vmatpush.msra.mxu0 0.0
        %1398 = vmatpush.msra.mxu0 0.0
        %1399 = vmatpush.msra.mxu0 0.0
        %1400 = vmatpush.msra.mxu0 0.0
        %1401 = vmatpush.msra.mxu0 0.0
        %1402 = vmatpush.msra.mxu0 0.0
        %1403 = vmatpush.msra.mxu0 0.0
        %1404 = vmatpush.msra.mxu0 0.0
        %1405 = vmatpush.msra.mxu0 %v1329
        %1406 = vmatpush.msra.mxu0 %v1302
        %1407 = vmatpush.msra.mxu0 %v1299
        %1408 = vmatpush.msra.mxu0 %v1296
        %1409 = vmatpush.msra.mxu0 %v1293
        %1410 = vmatpush.msra.mxu0 %v1290
        %1411 = vmatmul.f32.gmra.mxu0 %v1317
        %v1412 = vpop.f32.mrf.mxu0
        %v1413 = vadd.f32 %v1384, %v1412
        %1414 = vmatmul.f32.gmra.mxu0 %v1320
        %v1415 = vpop.f32.mrf.mxu0
        %v1416 = vadd.f32 %v1387, %v1415
        %1417 = vmatmul.f32.gmra.mxu0 %v1323
        %v1418 = vpop.f32.mrf.mxu0
        %v1419 = vadd.f32 %v1390, %v1418
        %1420 = vmatmul.f32.gmra.mxu0 %v1326
        %v1421 = vpop.f32.mrf.mxu0
        %v1422 = vadd.f32 %v1393, %v1421
        %1423 = vdwg.mxu0
        %1424 = vmatpush.msra.mxu0 %v1240
        %1425 = vmatpush.msra.mxu0 %v1237
        %1426 = vmatpush.msra.mxu0 %v1234
        %1427 = vmatpush.msra.mxu0 %v1231
        %1428 = vmatpush.msra.mxu0 %v1228
        %1429 = vmatpush.msra.mxu0 %v1225
        %1430 = vmatpush.msra.mxu0 %v1222
        %1431 = vmatpush.msra.mxu0 %v1219
        %1432 = vmatpush.msra.mxu0 %v1216
        %1433 = vmatpush.msra.mxu0 %v1213
        %1434 = vmatpush.msra.mxu0 %v1210
        %1435 = vmatpush.msra.mxu0 %v1207
        %1436 = vmatpush.msra.mxu0 %v1204
        %1437 = vmatpush.msra.mxu0 %v1201
        %1438 = vmatpush.msra.mxu0 %v1198
        %1439 = vmatpush.msra.mxu0 %v1195
        %1440 = vmatmul.f32.gmra.mxu0 %v1182
        %v1441 = vpop.f32.mrf.mxu0
        %v1442 = vadd.f32 %v1311, %v1441
        %1443 = vmatmul.f32.gmra.mxu0 %v1185
        %v1444 = vpop.f32.mrf.mxu0
        %v1445 = vadd.f32 %v1311, %v1444
        %1446 = vmatmul.f32.gmra.mxu0 %v1188
        %v1447 = vpop.f32.mrf.mxu0
        %v1448 = vadd.f32 %v1311, %v1447
        %1449 = vmatmul.f32.gmra.mxu0 %v1191
        %v1450 = vpop.f32.mrf.mxu0
        %v1451 = vadd.f32 %v1311, %v1450
        %1452 = vdwg.mxu0
        %1453 = vmatpush.msra.mxu0 %v1288
        %1454 = vmatpush.msra.mxu0 %v1285
        %1455 = vmatpush.msra.mxu0 %v1282
        %1456 = vmatpush.msra.mxu0 %v1279
        %1457 = vmatpush.msra.mxu0 %v1276
        %1458 = vmatpush.msra.mxu0 %v1273
        %1459 = vmatpush.msra.mxu0 %v1270
        %1460 = vmatpush.msra.mxu0 %v1267
        %1461 = vmatpush.msra.mxu0 %v1264
        %1462 = vmatpush.msra.mxu0 %v1261
        %1463 = vmatpush.msra.mxu0 %v1258
        %1464 = vmatpush.msra.mxu0 %v1255
        %1465 = vmatpush.msra.mxu0 %v1252
        %1466 = vmatpush.msra.mxu0 %v1249
        %1467 = vmatpush.msra.mxu0 %v1246
        %1468 = vmatpush.msra.mxu0 %v1243
        %1469 = vmatmul.f32.gmra.mxu0 %v1183
        %v1470 = vpop.f32.mrf.mxu0
        %v1471 = vadd.f32 %v1442, %v1470
        %1472 = vmatmul.f32.gmra.mxu0 %v1186
        %v1473 = vpop.f32.mrf.mxu0
        %v1474 = vadd.f32 %v1445, %v1473
        %1475 = vmatmul.f32.gmra.mxu0 %v1189
        %v1476 = vpop.f32.mrf.mxu0
        %v1477 = vadd.f32 %v1448, %v1476
        %1478 = vmatmul.f32.gmra.mxu0 %v1192
        %v1479 = vpop.f32.mrf.mxu0
        %v1480 = vadd.f32 %v1451, %v1479
        %1481 = vdwg.mxu0
        %1482 = vmatpush.msra.mxu0 0.0
        %1483 = vmatpush.msra.mxu0 0.0
        %1484 = vmatpush.msra.mxu0 0.0
        %1485 = vmatpush.msra.mxu0 0.0
        %1486 = vmatpush.msra.mxu0 0.0
        %1487 = vmatpush.msra.mxu0 0.0
        %1488 = vmatpush.msra.mxu0 0.0
        %1489 = vmatpush.msra.mxu0 0.0
        %1490 = vmatpush.msra.mxu0 0.0
        %1491 = vmatpush.msra.mxu0 0.0
        %1492 = vmatpush.msra.mxu0 %v1332
        %1493 = vmatpush.msra.mxu0 %v1303
        %1494 = vmatpush.msra.mxu0 %v1300
        %1495 = vmatpush.msra.mxu0 %v1297
        %1496 = vmatpush.msra.mxu0 %v1294
        %1497 = vmatpush.msra.mxu0 %v1291
        %1498 = vmatmul.f32.gmra.mxu0 %v1317
        %v1499 = vpop.f32.mrf.mxu0
        %v1500 = vadd.f32 %v1471, %v1499
        %1501 = vmatmul.f32.gmra.mxu0 %v1320
        %v1502 = vpop.f32.mrf.mxu0
        %v1503 = vadd.f32 %v1474, %v1502
        %1504 = vmatmul.f32.gmra.mxu0 %v1323
        %v1505 = vpop.f32.mrf.mxu0
        %v1506 = vadd.f32 %v1477, %v1505
        %1507 = vmatmul.f32.gmra.mxu0 %v1326
        %v1508 = vpop.f32.mrf.mxu0
        %v1509 = vadd.f32 %v1480, %v1508
        %1510 = vdwg.mxu0
        %1511 = vmatpush.msra.mxu0 %v1241
        %1512 = vmatpush.msra.mxu0 %v1238
        %1513 = vmatpush.msra.mxu0 %v1235
        %1514 = vmatpush.msra.mxu0 %v1232
        %1515 = vmatpush.msra.mxu0 %v1229
        %1516 = vmatpush.msra.mxu0 %v1226
        %1517 = vmatpush.msra.mxu0 %v1223
        %1518 = vmatpush.msra.mxu0 %v1220
        %1519 = vmatpush.msra.mxu0 %v1217
        %1520 = vmatpush.msra.mxu0 %v1214
        %1521 = vmatpush.msra.mxu0 %v1211
        %1522 = vmatpush.msra.mxu0 %v1208
        %1523 = vmatpush.msra.mxu0 %v1205
        %1524 = vmatpush.msra.mxu0 %v1202
        %1525 = vmatpush.msra.mxu0 %v1199
        %1526 = vmatpush.msra.mxu0 %v1196
        %1527 = vmatmul.f32.gmra.mxu0 %v1182
        %v1528 = vpop.f32.mrf.mxu0
        %v1529 = vadd.f32 %v1312, %v1528
        %1530 = vmatmul.f32.gmra.mxu0 %v1185
        %v1531 = vpop.f32.mrf.mxu0
        %v1532 = vadd.f32 %v1312, %v1531
        %1533 = vmatmul.f32.gmra.mxu0 %v1188
        %v1534 = vpop.f32.mrf.mxu0
        %v1535 = vadd.f32 %v1312, %v1534
        %1536 = vmatmul.f32.gmra.mxu0 %v1191
        %v1537 = vpop.f32.mrf.mxu0
        %v1538 = vadd.f32 %v1312, %v1537
        %1539 = vdwg.mxu0
        %1540 = vmatpush.msra.mxu0 %v1289
        %1541 = vmatpush.msra.mxu0 %v1286
        %1542 = vmatpush.msra.mxu0 %v1283
        %1543 = vmatpush.msra.mxu0 %v1280
        %1544 = vmatpush.msra.mxu0 %v1277
        %1545 = vmatpush.msra.mxu0 %v1274
        %1546 = vmatpush.msra.mxu0 %v1271
        %1547 = vmatpush.msra.mxu0 %v1268
        %1548 = vmatpush.msra.mxu0 %v1265
        %1549 = vmatpush.msra.mxu0 %v1262
        %1550 = vmatpush.msra.mxu0 %v1259
        %1551 = vmatpush.msra.mxu0 %v1256
        %1552 = vmatpush.msra.mxu0 %v1253
        %1553 = vmatpush.msra.mxu0 %v1250
        %1554 = vmatpush.msra.mxu0 %v1247
        %1555 = vmatpush.msra.mxu0 %v1244
        %1556 = vmatmul.f32.gmra.mxu0 %v1183
        %v1557 = vpop.f32.mrf.mxu0
        %v1558 = vadd.f32 %v1529, %v1557
        %1559 = vmatmul.f32.gmra.mxu0 %v1186
        %v1560 = vpop.f32.mrf.mxu0
        %v1561 = vadd.f32 %v1532, %v1560
        %1562 = vmatmul.f32.gmra.mxu0 %v1189
        %v1563 = vpop.f32.mrf.mxu0
        %v1564 = vadd.f32 %v1535, %v1563
        %1565 = vmatmul.f32.gmra.mxu0 %v1192
        %v1566 = vpop.f32.mrf.mxu0
        %v1567 = vadd.f32 %v1538, %v1566
        %1568 = vdwg.mxu0
        %1569 = vmatpush.msra.mxu0 0.0
        %1570 = vmatpush.msra.mxu0 0.0
        %1571 = vmatpush.msra.mxu0 0.0
        %1572 = vmatpush.msra.mxu0 0.0
        %1573 = vmatpush.msra.mxu0 0.0
        %1574 = vmatpush.msra.mxu0 0.0
        %1575 = vmatpush.msra.mxu0 0.0
        %1576 = vmatpush.msra.mxu0 0.0
        %1577 = vmatpush.msra.mxu0 0.0
        %1578 = vmatpush.msra.mxu0 0.0
        %1579 = vmatpush.msra.mxu0 %v1335
        %1580 = vmatpush.msra.mxu0 %v1304
        %1581 = vmatpush.msra.mxu0 %v1301
        %1582 = vmatpush.msra.mxu0 %v1298
        %1583 = vmatpush.msra.mxu0 %v1295
        %1584 = vmatpush.msra.mxu0 %v1292
        %1585 = vmatmul.f32.gmra.mxu0 %v1317
        %v1586 = vpop.f32.mrf.mxu0
        %v1587 = vadd.f32 %v1558, %v1586
        %1588 = vmatmul.f32.gmra.mxu0 %v1320
        %v1589 = vpop.f32.mrf.mxu0
        %v1590 = vadd.f32 %v1561, %v1589
        %1591 = vmatmul.f32.gmra.mxu0 %v1323
        %v1592 = vpop.f32.mrf.mxu0
        %v1593 = vadd.f32 %v1564, %v1592
        %1594 = vmatmul.f32.gmra.mxu0 %v1326
        %v1595 = vpop.f32.mrf.mxu0
        %v1596 = vadd.f32 %v1567, %v1595
        %1597 = vdwg.mxu0
        %v1598 = vmax.f32 %v1413, 0.0
        %v1599 = vmax.f32 %v1500, 0.0
        %v1600 = vmax.f32 %v1587, 0.0
        %v1601 = vmax.f32 %v1416, 0.0
        %v1602 = vmax.f32 %v1503, 0.0
        %v1603 = vmax.f32 %v1590, 0.0
        %v1604 = vmax.f32 %v1419, 0.0
        %v1605 = vmax.f32 %v1506, 0.0
        %v1606 = vmax.f32 %v1593, 0.0
        %v1607 = vmax.f32 %v1422, 0.0
        %v1608 = vmax.f32 %v1509, 0.0
        %v1609 = vmax.f32 %v1596, 0.0
        %v1610 = vld [vmem:[%s10] sm:$0xff]
        %v1611 = vld [vmem:[%s10 + $0x8] sm:$0xff]
        %v1612 = vld [vmem:[%s10 + $0x10] sm:$0xff]
        %v1613 = vld [vmem:[%s10 + $0x18] sm:$0xff]
        %v1614 = vld [vmem:[%s10 + $0x20] sm:$0xff]
        %v1615 = vld [vmem:[%s10 + $0x28] sm:$0xff]
        %v1616 = vld [vmem:[%s10 + $0x30] sm:$0xff]
        %v1617 = vld [vmem:[%s10 + $0x38] sm:$0xff]
        %v1618 = vld [vmem:[%s10 + $0x40] sm:$0xff]
        %v1619 = vld [vmem:[%s10 + $0x48] sm:$0xff]
        %v1620 = vld [vmem:[%s10 + $0x50] sm:$0xff]
        %v1621 = vld [vmem:[%s10 + $0x58] sm:$0xff]
        %v1622 = vld [vmem:[%s10 + $0x60] sm:$0xff]
        %v1623 = vld [vmem:[%s10 + $0x68] sm:$0xff]
        %v1624 = vld [vmem:[%s10 + $0x70] sm:$0xff]
        %v1625 = vld [vmem:[%s10 + $0x78] sm:$0xff]
        %v1626 = vld [vmem:[%s10 + $0x80] sm:$0xff]
        %v1627 = vld [vmem:[%s10 + $0x88] sm:$0xff]
        %v1628 = vld [vmem:[%s10 + $0x90] sm:$0xff]
        %v1629 = vld [vmem:[%s10 + $0x98] sm:$0xff]
        %v1630 = vld [vmem:[%s10 + $0xa0] sm:$0xff]
        %v1631 = vld [vmem:[%s10 + $0xa8] sm:$0xff]
        %v1632 = vld [vmem:[%s10 + $0xb0] sm:$0xff]
        %v1633 = vld [vmem:[%s10 + $0xb8] sm:$0xff]
        %v1634 = vld [vmem:[%s10 + $0xc0] sm:$0xff]
        %v1635 = vld [vmem:[%s10 + $0xc8] sm:$0xff]
        %v1636 = vld [vmem:[%s10 + $0xd0] sm:$0xff]
        %v1637 = vld [vmem:[%s10 + $0xd8] sm:$0xff]
        %v1638 = vld [vmem:[%s10 + $0xe0] sm:$0xff]
        %v1639 = vld [vmem:[%s10 + $0xe8] sm:$0xff]
        %v1640 = vld [vmem:[%s10 + $0xf0] sm:$0xff]
        %v1641 = vld [vmem:[%s10 + $0xf8] sm:$0xff]
        %v1642 = vld [vmem:[%s10 + $0x100] sm:$0xff]
        %v1643 = vld [vmem:[%s10 + $0x108] sm:$0xff]
        %v1644 = vld [vmem:[%s10 + $0x110] sm:$0xff]
        %v1645 = vld [vmem:[%s10 + $0x118] sm:$0xff]
        %v1646 = vld [vmem:[%s10 + $0x120] sm:$0xff]
        %v1647 = vld [vmem:[%s10 + $0x128] sm:$0xf]
        %v1648 = vld [vmem:[%s11] sm:$0x1]
        %v1650 = vperm.slane %v1648, 0
        %v1653 = vsel %vm898, %v1600, 0
        %v1656 = vsel %vm898, %v1603, 0
        %v1659 = vsel %vm898, %v1606, 0
        %v1662 = vsel %vm898, %v1609, 0
        %v1665 = vsel %vm911, %v1647, 0
        %1667 = vmatpush.msra.mxu0 %v1625
        %1668 = vmatpush.msra.mxu0 %v1624
        %1669 = vmatpush.msra.mxu0 %v1623
        %1670 = vmatpush.msra.mxu0 %v1622
        %1671 = vmatpush.msra.mxu0 %v1621
        %1672 = vmatpush.msra.mxu0 %v1620
        %1673 = vmatpush.msra.mxu0 %v1619
        %1674 = vmatpush.msra.mxu0 %v1618
        %1675 = vmatpush.msra.mxu0 %v1617
        %1676 = vmatpush.msra.mxu0 %v1616
        %1677 = vmatpush.msra.mxu0 %v1615
        %1678 = vmatpush.msra.mxu0 %v1614
        %1679 = vmatpush.msra.mxu0 %v1613
        %1680 = vmatpush.msra.mxu0 %v1612
        %1681 = vmatpush.msra.mxu0 %v1611
        %1682 = vmatpush.msra.mxu0 %v1610
        %1683 = vmatmul.f32.gmra.mxu0 %v1598
        %v1684 = vpop.f32.mrf.mxu0
        %v1685 = vadd.f32 %v1650, %v1684
        %1686 = vmatmul.f32.gmra.mxu0 %v1601
        %v1687 = vpop.f32.mrf.mxu0
        %v1688 = vadd.f32 %v1650, %v1687
        %1689 = vmatmul.f32.gmra.mxu0 %v1604
        %v1690 = vpop.f32.mrf.mxu0
        %v1691 = vadd.f32 %v1650, %v1690
        %1692 = vmatmul.f32.gmra.mxu0 %v1607
        %v1693 = vpop.f32.mrf.mxu0
        %v1694 = vadd.f32 %v1650, %v1693
        %1695 = vdwg.mxu0
        %1696 = vmatpush.msra.mxu0 %v1641
        %1697 = vmatpush.msra.mxu0 %v1640
        %1698 = vmatpush.msra.mxu0 %v1639
        %1699 = vmatpush.msra.mxu0 %v1638
        %1700 = vmatpush.msra.mxu0 %v1637
        %1701 = vmatpush.msra.mxu0 %v1636
        %1702 = vmatpush.msra.mxu0 %v1635
        %1703 = vmatpush.msra.mxu0 %v1634
        %1704 = vmatpush.msra.mxu0 %v1633
        %1705 = vmatpush.msra.mxu0 %v1632
        %1706 = vmatpush.msra.mxu0 %v1631
        %1707 = vmatpush.msra.mxu0 %v1630
        %1708 = vmatpush.msra.mxu0 %v1629
        %1709 = vmatpush.msra.mxu0 %v1628
        %1710 = vmatpush.msra.mxu0 %v1627
        %1711 = vmatpush.msra.mxu0 %v1626
        %1712 = vmatmul.f32.gmra.mxu0 %v1599
        %v1713 = vpop.f32.mrf.mxu0
        %v1714 = vadd.f32 %v1685, %v1713
        %1715 = vmatmul.f32.gmra.mxu0 %v1602
        %v1716 = vpop.f32.mrf.mxu0
        %v1717 = vadd.f32 %v1688, %v1716
        %1718 = vmatmul.f32.gmra.mxu0 %v1605
        %v1719 = vpop.f32.mrf.mxu0
        %v1720 = vadd.f32 %v1691, %v1719
        %1721 = vmatmul.f32.gmra.mxu0 %v1608
        %v1722 = vpop.f32.mrf.mxu0
        %v1723 = vadd.f32 %v1694, %v1722
        %1724 = vdwg.mxu0
        %1725 = vmatpush.msra.mxu0 0.0
        %1726 = vmatpush.msra.mxu0 0.0
        %1727 = vmatpush.msra.mxu0 0.0
        %1728 = vmatpush.msra.mxu0 0.0
        %1729 = vmatpush.msra.mxu0 0.0
        %1730 = vmatpush.msra.mxu0 0.0
        %1731 = vmatpush.msra.mxu0 0.0
        %1732 = vmatpush.msra.mxu0 0.0
        %1733 = vmatpush.msra.mxu0 0.0
        %1734 = vmatpush.msra.mxu0 0.0
        %1735 = vmatpush.msra.mxu0 %v1665
        %1736 = vmatpush.msra.mxu0 %v1646
        %1737 = vmatpush.msra.mxu0 %v1645
        %1738 = vmatpush.msra.mxu0 %v1644
        %1739 = vmatpush.msra.mxu0 %v1643
        %1740 = vmatpush.msra.mxu0 %v1642
        %1741 = vmatmul.f32.gmra.mxu0 %v1653
        %v1742 = vpop.f32.mrf.mxu0
        %v1743 = vadd.f32 %v1714, %v1742
        %1744 = vmatmul.f32.gmra.mxu0 %v1656
        %v1745 = vpop.f32.mrf.mxu0
        %v1746 = vadd.f32 %v1717, %v1745
        %1747 = vmatmul.f32.gmra.mxu0 %v1659
        %v1748 = vpop.f32.mrf.mxu0
        %v1749 = vadd.f32 %v1720, %v1748
        %1750 = vmatmul.f32.gmra.mxu0 %v1662
        %v1751 = vpop.f32.mrf.mxu0
        %v1752 = vadd.f32 %v1723, %v1751
        %1753 = vdwg.mxu0
        %vm1754 = vcmp.gt.f32.partialorder %v1743, 20.0
        %vm1755 = vcmp.gt.f32.partialorder %v1746, 20.0
        %vm1756 = vcmp.gt.f32.partialorder %v1749, 20.0
        %vm1757 = vcmp.gt.f32.partialorder %v1752, 20.0
        %v1758 = vmin.f32 %v1743, 20.0
        %v1759 = vmin.f32 %v1746, 20.0
        %v1760 = vmin.f32 %v1749, 20.0
        %v1761 = vmin.f32 %v1752, 20.0
        %v1762 = vmul.f32 %v1758, 1.442695
        %v1763 = vpow.pop %v1762
        %v1764 = vmul.f32 %v1759, 1.442695
        %v1765 = vpow.pop %v1764
        %v1766 = vmul.f32 %v1760, 1.442695
        %v1767 = vpow.pop %v1766
        %v1768 = vmul.f32 %v1761, 1.442695
        %v1769 = vpow.pop %v1768
        %v1770 = vadd.f32 %v1763, 1.0
        %v1771 = vlog2.pop %v1770
        %v1772 = vmul.f32 %v1771, 0.6931472
        %v1773 = vmul.f32 -0.5, %v1763
        %v1774 = vadd.f32 %v1773, 1.0
        %v1775 = vmul.f32 %v1774, %v1763
        %v1776 = vand.u32 2147483647, %v1763
        %vm1777 = vcmp.lt.f32.partialorder %v1776, 0.0004427343
        %v1778 = vsel %vm1777, %v1775, %v1772
        %v1779 = vadd.f32 %v1765, 1.0
        %v1780 = vlog2.pop %v1779
        %v1781 = vmul.f32 %v1780, 0.6931472
        %v1782 = vmul.f32 -0.5, %v1765
        %v1783 = vadd.f32 %v1782, 1.0
        %v1784 = vmul.f32 %v1783, %v1765
        %v1785 = vand.u32 2147483647, %v1765
        %vm1786 = vcmp.lt.f32.partialorder %v1785, 0.0004427343
        %v1787 = vsel %vm1786, %v1784, %v1781
        %v1788 = vadd.f32 %v1767, 1.0
        %v1789 = vlog2.pop %v1788
        %v1790 = vmul.f32 %v1789, 0.6931472
        %v1791 = vmul.f32 -0.5, %v1767
        %v1792 = vadd.f32 %v1791, 1.0
        %v1793 = vmul.f32 %v1792, %v1767
        %v1794 = vand.u32 2147483647, %v1767
        %vm1795 = vcmp.lt.f32.partialorder %v1794, 0.0004427343
        %v1796 = vsel %vm1795, %v1793, %v1790
        %v1797 = vadd.f32 %v1769, 1.0
        %v1798 = vlog2.pop %v1797
        %v1799 = vmul.f32 %v1798, 0.6931472
        %v1800 = vmul.f32 -0.5, %v1769
        %v1801 = vadd.f32 %v1800, 1.0
        %v1802 = vmul.f32 %v1801, %v1769
        %v1803 = vand.u32 2147483647, %v1769
        %vm1804 = vcmp.lt.f32.partialorder %v1803, 0.0004427343
        %v1805 = vsel %vm1804, %v1802, %v1799
        %v1806 = vsel %vm1754, %v1743, %v1778
        %v1807 = vsel %vm1755, %v1746, %v1787
        %v1808 = vsel %vm1756, %v1749, %v1796
        %v1809 = vsel %vm1757, %v1752, %v1805
        %v1810 = vlaneseq
        %v1811 = vand.u32 %v1810, 127
        %vm1812 = vcmp.eq.s32.totalorder %v1811, 0
        %v1813 = vxor.u32 %v1743, 2147483648
        %v1814 = vxor.u32 %v1746, 2147483648
        %v1815 = vxor.u32 %v1749, 2147483648
        %v1816 = vxor.u32 %v1752, 2147483648
        %v1817 = vmul.f32 %v1813, 1.442695
        %v1818 = vpow.pop %v1817
        %v1819 = vmul.f32 %v1814, 1.442695
        %v1820 = vpow.pop %v1819
        %v1821 = vmul.f32 %v1815, 1.442695
        %v1822 = vpow.pop %v1821
        %v1823 = vmul.f32 %v1816, 1.442695
        %v1824 = vpow.pop %v1823
        %v1825 = vadd.f32 %v1818, 1.0
        %v1826 = vadd.f32 %v1820, 1.0
        %v1827 = vadd.f32 %v1822, 1.0
        %v1828 = vadd.f32 %v1824, 1.0
        %v1829 = vrcp.pop %v1825
        %v1830 = vmul.f32 %v1825, %v1829
        %v1831 = vsub.f32 1.0, %v1830
        %v1832 = vmul.f32 %v1829, %v1831
        %v1833 = vadd.f32 %v1829, %v1832
        %vm1834 = vweird.f32 %v1825
        %vm1835 = vweird.f32 %v1829
        %vm1836 = vmor %vm1834, %vm1835
        %v1837 = vsel %vm1836, %v1829, %v1833
        %v1838 = vand.u32 2147483647, %v1825
        %vm1839 = vcmp.eq.f32.partialorder %v1838, 8.507059e+37
        %v1840 = vand.u32 %v1825, 2147483648
        %v1841 = vor.u32 1.1754944e-38, %v1840
        %v1842 = vsel %vm1839, %v1841, %v1837
        %v1843 = vmul.f32 1.0, %v1842
        %v1844 = vrcp.pop %v1826
        %v1845 = vmul.f32 %v1826, %v1844
        %v1846 = vsub.f32 1.0, %v1845
        %v1847 = vmul.f32 %v1844, %v1846
        %v1848 = vadd.f32 %v1844, %v1847
        %vm1849 = vweird.f32 %v1826
        %vm1850 = vweird.f32 %v1844
        %vm1851 = vmor %vm1849, %vm1850
        %v1852 = vsel %vm1851, %v1844, %v1848
        %v1853 = vand.u32 2147483647, %v1826
        %vm1854 = vcmp.eq.f32.partialorder %v1853, 8.507059e+37
        %v1855 = vand.u32 %v1826, 2147483648
        %v1856 = vor.u32 1.1754944e-38, %v1855
        %v1857 = vsel %vm1854, %v1856, %v1852
        %v1858 = vmul.f32 1.0, %v1857
        %v1859 = vrcp.pop %v1827
        %v1860 = vmul.f32 %v1827, %v1859
        %v1861 = vsub.f32 1.0, %v1860
        %v1862 = vmul.f32 %v1859, %v1861
        %v1863 = vadd.f32 %v1859, %v1862
        %vm1864 = vweird.f32 %v1827
        %vm1865 = vweird.f32 %v1859
        %vm1866 = vmor %vm1864, %vm1865
        %v1867 = vsel %vm1866, %v1859, %v1863
        %v1868 = vand.u32 2147483647, %v1827
        %vm1869 = vcmp.eq.f32.partialorder %v1868, 8.507059e+37
        %v1870 = vand.u32 %v1827, 2147483648
        %v1871 = vor.u32 1.1754944e-38, %v1870
        %v1872 = vsel %vm1869, %v1871, %v1867
        %v1873 = vmul.f32 1.0, %v1872
        %v1874 = vrcp.pop %v1828
        %v1875 = vmul.f32 %v1828, %v1874
        %v1876 = vsub.f32 1.0, %v1875
        %v1877 = vmul.f32 %v1874, %v1876
        %v1878 = vadd.f32 %v1874, %v1877
        %vm1879 = vweird.f32 %v1828
        %vm1880 = vweird.f32 %v1874
        %vm1881 = vmor %vm1879, %vm1880
        %v1882 = vsel %vm1881, %v1874, %v1878
        %v1883 = vand.u32 2147483647, %v1828
        %vm1884 = vcmp.eq.f32.partialorder %v1883, 8.507059e+37
        %v1885 = vand.u32 %v1828, 2147483648
        %v1886 = vor.u32 1.1754944e-38, %v1885
        %v1887 = vsel %vm1884, %v1886, %v1882
        %v1888 = vmul.f32 1.0, %v1887
        %v1889 = vsel %vm1812, %v1806, %v1843
        %v1890 = vsel %vm1812, %v1807, %v1858
        %v1891 = vsel %vm1812, %v1808, %v1873
        %v1892 = vsel %vm1812, %v1809, %v1888
        %vm1893 = vcmask 31744
        %1894 = vst.msk [vmem:[%s449] sm:$0xff] %vm1893, %v1889
        %1895 = vst.msk [vmem:[%s449 + $0x8] sm:$0xff] %vm1893, %v1890
        %1896 = vst.msk [vmem:[%s449 + $0x10] sm:$0xff] %vm1893, %v1891
        %1897 = vst.msk [vmem:[%s449 + $0x18] sm:$0xff] %vm1893, %v1892
        %s1898 = smul.u32 4, %s25
        %p1899 = scmp.lt.s32.totalorder %s1898, 7
        %s1900 = scalar_select %p1899, %s1898, 7
        %s1901 = smul.addr %s1900, 8
        %s1902 = scalar_lea.vmem %s12, %s1901
        // Predicated region
        $region77: #{tpu_custom_call.1} parent=67 // pred_check
          %p1903 = pneg %p300
        $region78: #{tpu_custom_call.1} parent=67 // pred_check_branch
          %1905 = sbr.rel (%p1903) target = $region80
        $region79: #{tpu_custom_call.1} parent=67 // pred_region
          %s1906 = smul.u32 4, %s25
        $region80: #{tpu_custom_call.1} parent=67 // pred_fallthru
          _
      $region68: #{tpu_custom_call.1} parent=5 // pred_fallthru
        _
      %p1907 = scmp.le.s32.totalorder 2, %s20
      // Predicated region
      $region81: #{tpu_custom_call.1} parent=5 // pred_check
        %p1908 = pneg %p1907
      $region82: #{tpu_custom_call.1} parent=5 // pred_check_branch
        %1910 = sbr.rel (%p1908) target = $region84
      $region83: #{tpu_custom_call.1} parent=5 // pred_region
        %s1911 = ssub.s32 %s20, 2
        // Predicated region
        $region85: #{tpu_custom_call.1} parent=83 // pred_check
          %p1912 = pneg %p306
        $region86: #{tpu_custom_call.1} parent=83 // pred_check_branch
          %1914 = sbr.rel (%p1912) target = $region88
        $region87: #{tpu_custom_call.1} parent=83 // pred_region
          %s1915 = smul.u32 4, %s26
          %p1916 = scmp.lt.s32.totalorder %s1915, 7
          %s1917 = scalar_select %p1916, %s1915, 7
          %s1918 = smul.addr %s1917, 8
          %s1919 = scalar_lea.vmem %s12, %s1918
        $region88: #{tpu_custom_call.1} parent=83 // pred_fallthru
          _
      $region84: #{tpu_custom_call.1} parent=5 // pred_fallthru
        _
    $region6: #{tpu_custom_call.1} parent=1 // loop_footer
      %s24 = sadd.s32 1, %s20
    $region7: #{tpu_custom_call.1} parent=1 // loop_footer_branch
      %19 = sbr.rel target = $region3
    $region8: #{tpu_custom_call.1} parent=1 // loop_exit
      _
    %1920 = vsyncpa [#allocation3], 1
    %s1921 = scalar_lea.sflag [#allocation3], 1
    %1922 = vsyncpa %s1921, 1
    %1923 = vsyncpa [#allocation5], 1

</llo_original>
